<compile_context>
chip_gen: v5e
topology: v5e:2x2
jax: 0.10.0
libtpu: 0.0.40
codegen_flags: <defaults>
</compile_context>

<pallas_src>
import jax
import jax.numpy as jnp
from jax.experimental import pallas as pl
from jax.experimental.pallas import tpu as pltpu

# ----------------------------- small config -----------------------------
VOCAB   = 100      # vocab_size
MAX_POS = 32       # max_position_embeddings
B       = 2        # batch
S       = 16       # seq length
H       = 64       # hidden dim ("dim")
NH      = 4        # num attention heads
HD      = H // NH  # head dim
FFN     = 128      # hidden_dim of FFN
LAYERS  = 2        # num_hidden_layers
EPS     = 1e-12    # LayerNorm eps (HF DistilBERT default)
M       = B * S    # folded batch*seq rows

# packed weight-slab column layout (lane-tile aligned starts: 0 / 256 / 384)
C_QKV = 0                  # fused [Wq*scale | Wk | Wv]  -> width 3*H = 192
PAD_W = 64                 # zero pad so W1 starts at a 128-lane boundary
C_W1  = 3 * H + PAD_W      # 256, width FFN = 128
C_WO  = C_W1 + FFN         # 384, width H = 64
WA    = C_WO + H           # 448 total columns

# packed f32 param slab: rows of width PW (everything starts at lane 0)
PW     = 3 * H             # 192 (widest row = fused qkv bias)
NPROWS = 2 + 8 * LAYERS    # emb LN (2 rows) + 8 rows per layer


# ----------------------------- kernel helpers -----------------------------
def _layer_norm(x, gamma, beta):
    # x: (S, H); gamma/beta: (1, H)
    mu = jnp.mean(x, axis=-1, keepdims=True)
    xc = x - mu
    var = jnp.mean(xc * xc, axis=-1, keepdims=True)
    return xc * jax.lax.rsqrt(var + EPS) * gamma + beta


# ----------------------------- fused model kernel -----------------------------
def model_kernel(x_ref, bias_ref, wA_ref, w2_ref, p_ref, o_ref):
    """One grid point == one batch element; whole model stays resident in VMEM."""
    f32, bf16 = jnp.float32, jnp.bfloat16

    def pvec(row, width):                       # (1, width) f32 param row
        return p_ref[row:row + 1, :width]

    # Embedding LayerNorm (x_ref holds word_emb + pos_emb for this batch element).
    x = _layer_norm(x_ref[...], pvec(0, H), pvec(1, H))
    bias = bias_ref[...]                        # (S, S) additive key-padding mask

    for l in range(LAYERS):                     # static unroll; x never leaves VMEM
        base = 2 + l * 8
        wA_l = wA_ref[l]                        # (H, WA) bf16
        x16 = x.astype(bf16)

        # ---- fused QKV projection: one lane-dense (H, 3H) matmul (scale folded into Wq/bq) ----
        qkv = jnp.dot(x16, wA_l[:, C_QKV:C_QKV + 3 * H],
                      preferred_element_type=f32) + pvec(base + 0, 3 * H)   # (S, 3H)

        # ---- per-head attention on lane slices of the fused result ----
        ctx_heads = []
        for h in range(NH):                     # static unroll over heads
            qh = qkv[:, h * HD:(h + 1) * HD].astype(bf16)
            kh = qkv[:, H + h * HD:H + (h + 1) * HD].astype(bf16)
            vh = qkv[:, 2 * H + h * HD:2 * H + (h + 1) * HD].astype(bf16)
            # scores[i, j] = qh[i] . kh[j]   (bf16 MXU inputs, f32 accumulate)
            scores = jax.lax.dot_general(qh, kh, (((1,), (1,)), ((), ())),
                                         preferred_element_type=f32) + bias
            mrow = jnp.max(scores, axis=-1, keepdims=True)
            e = jnp.exp(scores - mrow)
            probs = e * pl.reciprocal(jnp.sum(e, axis=-1, keepdims=True), approx=True)
            ctx_heads.append(jnp.dot(probs.astype(bf16), vh,
                                     preferred_element_type=f32))           # (S, HD)
        ctx = jnp.concatenate(ctx_heads, axis=-1)                           # (S, H)

        # ---- single (H, H) output projection ----
        attn = jnp.dot(ctx.astype(bf16), wA_l[:, C_WO:C_WO + H],
                       preferred_element_type=f32) + pvec(base + 1, H)
        sa = _layer_norm(attn + x, pvec(base + 4, H), pvec(base + 5, H))

        # ---- feed-forward ----
        h1 = jnp.dot(sa.astype(bf16), wA_l[:, C_W1:C_W1 + FFN],
                     preferred_element_type=f32) + pvec(base + 2, FFN)
        # TODO(synk): HF DistilBERT uses exact (erf-based) GELU; tanh approximation used here.
        h1 = jax.nn.gelu(h1, approximate=True)
        h2 = jnp.dot(h1.astype(bf16), w2_ref[l],
                     preferred_element_type=f32) + pvec(base + 3, H)
        x = _layer_norm(h2 + sa, pvec(base + 6, H), pvec(base + 7, H))

    o_ref[...] = x


# ----------------------------- parameter init / packing -----------------------------
def init_params(key):
    def nrm(k, shape, scale=0.02):
        return scale * jax.random.normal(k, shape, dtype=jnp.float32)

    keys = jax.random.split(key, 4 + LAYERS)
    params = {
        "word_emb": nrm(keys[0], (VOCAB, H)),
        "pos_emb": nrm(keys[1], (MAX_POS, H)),
        "emb_ln_g": jnp.ones((1, H), jnp.float32),
        "emb_ln_b": jnp.zeros((1, H), jnp.float32),
        "layers": [],
    }
    for l in range(LAYERS):
        lk = jax.random.split(keys[4 + l], 8)
        params["layers"].append({
            "wq": nrm(lk[0], (H, H)),   "bq": jnp.zeros((1, H), jnp.float32),
            "wk": nrm(lk[1], (H, H)),   "bk": jnp.zeros((1, H), jnp.float32),
            "wv": nrm(lk[2], (H, H)),   "bv": jnp.zeros((1, H), jnp.float32),
            "wo": nrm(lk[3], (H, H)),   "bo": jnp.zeros((1, H), jnp.float32),
            "ln1_g": jnp.ones((1, H), jnp.float32),
            "ln1_b": jnp.zeros((1, H), jnp.float32),
            "w1": nrm(lk[4], (H, FFN)), "b1": jnp.zeros((1, FFN), jnp.float32),
            "w2": nrm(lk[5], (FFN, H)), "b2": jnp.zeros((1, H), jnp.float32),
            "ln2_g": jnp.ones((1, H), jnp.float32),
            "ln2_b": jnp.zeros((1, H), jnp.float32),
        })
    return params


def pack_params(params):
    """Pack ONCE at init: weight slabs (bf16) + bias/LN slab (f32). Not in the hot path."""
    f32, bf16 = jnp.float32, jnp.bfloat16
    # 1/sqrt(HD) = 0.25 is a power of two, so folding into (later-bf16) Wq and f32 bq is exact.
    scale = 1.0 / (HD ** 0.5)

    def row(v):
        v = jnp.asarray(v, f32).reshape(1, -1)
        return jnp.pad(v, ((0, 0), (0, PW - v.shape[1])))

    wA_layers, w2_layers = [], []
    p_rows = [row(params["emb_ln_g"]), row(params["emb_ln_b"])]
    pad = jnp.zeros((H, PAD_W), f32)
    for lp in params["layers"]:
        wqkv = jnp.concatenate([lp["wq"] * scale, lp["wk"], lp["wv"]], axis=1)   # (H, 3H)
        wA_layers.append(jnp.concatenate([wqkv, pad, lp["w1"], lp["wo"]], axis=1))  # (H, WA)
        w2_layers.append(lp["w2"])
        bqkv = jnp.concatenate([lp["bq"] * scale, lp["bk"], lp["bv"]], axis=1)   # (1, 3H)
        p_rows += [row(bqkv), row(lp["bo"]), row(lp["b1"]), row(lp["b2"]),
                   row(lp["ln1_g"]), row(lp["ln1_b"]), row(lp["ln2_g"]), row(lp["ln2_b"])]

    return {
        "word_emb": params["word_emb"].astype(f32),
        "pos_emb": params["pos_emb"].astype(f32),
        "wA": jnp.stack(wA_layers).astype(bf16),       # (L, H, WA)
        "w2": jnp.stack(w2_layers).astype(bf16),       # (L, FFN, H)
        "pvec": jnp.concatenate(p_rows, axis=0),       # (NPROWS, PW) f32
    }


# ----------------------------- full model forward -----------------------------
class TtBaseModelOutput:
    def __init__(self, last_hidden_state=None, hidden_states=None, attentions=None):
        self.last_hidden_state = last_hidden_state
        self.hidden_states = hidden_states
        self.attentions = attentions


@jax.jit
def _forward_impl(packed, input_ids, attention_mask):
    # TODO(synk): the word/pos embedding gather could move in-kernel via scalar-prefetched
    # input_ids + pl.Element row gather; kept as cheap XLA glue for now.
    we = jnp.take(packed["word_emb"], input_ids, axis=0)          # (B, S, H)
    pe = packed["pos_emb"][:S]                                    # (S, H)
    x = (we + pe[None, :, :]).reshape(M, H).astype(jnp.float32)   # batch folded into rows

    # Per-batch additive key-padding mask: 0 where key unmasked, -1e9 otherwise.
    key_ok = attention_mask > 0.5                                 # (B, S)
    bias = jnp.where(key_ok[:, None, :], 0.0, -1e9).astype(jnp.float32)   # (B, 1, S)
    bias = jnp.broadcast_to(bias, (B, S, S)).reshape(M, S)

    y = pl.pallas_call(
        model_kernel,
        out_shape=jax.ShapeDtypeStruct((M, H), jnp.float32),
        grid=(B,),
        in_specs=[
            pl.BlockSpec((S, H), lambda b: (b, 0)),                    # activations (per batch)
            pl.BlockSpec((S, S), lambda b: (b, 0)),                    # attention bias (per batch)
            pl.BlockSpec((LAYERS, H, WA), lambda b: (0, 0, 0)),        # bf16 weight slab (resident)
            pl.BlockSpec((LAYERS, FFN, H), lambda b: (0, 0, 0)),       # bf16 W2 slab (resident)
            pl.BlockSpec((NPROWS, PW), lambda b: (0, 0)),              # f32 bias/LN slab (resident)
        ],
        out_specs=pl.BlockSpec((S, H), lambda b: (b, 0)),
        compiler_params=pltpu.CompilerParams(dimension_semantics=("parallel",)),
    )(x, bias, packed["wA"], packed["w2"], packed["pvec"])

    return y.reshape(B, S, H)


def distilbert_forward(packed, input_ids, attention_mask=None):
    if attention_mask is None:
        # mirrors the module: missing attention_mask is replaced by all-ones
        attention_mask = jnp.ones(input_ids.shape, jnp.float32)
    return TtBaseModelOutput(
        last_hidden_state=_forward_impl(packed, input_ids, attention_mask))


# ----------------------------- main -----------------------------
if __name__ == "__main__":
    key = jax.random.PRNGKey(0)
    k_param, k_ids = jax.random.split(key)
    params = init_params(k_param)
    packed = pack_params(params)          # packed once, outside the per-call path
    input_ids = jax.random.randint(k_ids, (B, S), 0, VOCAB, dtype=jnp.int32)
    attention_mask = jnp.ones((B, S), jnp.float32)

    out = distilbert_forward(packed, input_ids, attention_mask)
    jax.block_until_ready(out.last_hidden_state)
    assert out.last_hidden_state.shape == (B, S, H)
    assert bool(jnp.all(jnp.isfinite(out.last_hidden_state)))
    print("KERNEL_OK")
</pallas_src>

<mosaic_0001>
module attributes {stable_mosaic.version = 11 : i64} {
  func.func @model_kernel(%arg0: i32, %arg1: memref<16x64xf32, #tpu.memory_space<vmem>>, %arg2: memref<16x16xf32, #tpu.memory_space<vmem>>, %arg3: memref<2x64x448xbf16, #tpu.memory_space<vmem>>, %arg4: memref<2x128x64xbf16, #tpu.memory_space<vmem>>, %arg5: memref<18x192xf32, #tpu.memory_space<vmem>>, %arg6: memref<16x64xf32, #tpu.memory_space<vmem>>) attributes {dimension_semantics = [#tpu.dimension_semantics<parallel>], iteration_bounds = array<i64: 2>, scalar_prefetch = 0 : i64, scratch_operands = 0 : i64, tpu.core_type = #tpu.core_type<tc>, window_params = [{transform_indices = @transform_0, window_bounds = array<i64: 16, 64>}, {transform_indices = @transform_1, window_bounds = array<i64: 16, 16>}, {pipeline_mode = #tpu.pipeline_mode<synchronous>, transform_indices = @transform_2, window_bounds = array<i64: 2, 64, 448>}, {pipeline_mode = #tpu.pipeline_mode<synchronous>, transform_indices = @transform_3, window_bounds = array<i64: 2, 128, 64>}, {pipeline_mode = #tpu.pipeline_mode<synchronous>, transform_indices = @transform_4, window_bounds = array<i64: 18, 192>}, {transform_indices = @transform_5, window_bounds = array<i64: 16, 64>}]} {
    %c0 = arith.constant 0 : index
    %c0_0 = arith.constant 0 : index
    %0 = vector.load %arg1[%c0, %c0_0] : memref<16x64xf32, #tpu.memory_space<vmem>>, vector<16x64xf32>
    %c0_1 = arith.constant 0 : index
    %c0_2 = arith.constant 0 : index
    %1 = vector.load %arg5[%c0_1, %c0_2] : memref<18x192xf32, #tpu.memory_space<vmem>>, vector<1x64xf32>
    %c1 = arith.constant 1 : index
    %c0_3 = arith.constant 0 : index
    %2 = vector.load %arg5[%c1, %c0_3] : memref<18x192xf32, #tpu.memory_space<vmem>>, vector<1x64xf32>
    %cst = arith.constant dense<0.000000e+00> : vector<16xf32>
    %3 = vector.multi_reduction <add>, %0, %cst [1] : vector<16x64xf32> to vector<16xf32>
    %4 = vector.shape_cast %3 : vector<16xf32> to vector<16x1xf32>
    %cst_4 = arith.constant 6.400000e+01 : f32
    %5 = vector.broadcast %cst_4 : f32 to vector<16x1xf32>
    %6 = arith.divf %4, %5 : vector<16x1xf32>
    %7 = vector.broadcast %6 : vector<16x1xf32> to vector<16x64xf32>
    %8 = arith.subf %0, %7 : vector<16x64xf32>
    %9 = arith.mulf %8, %8 : vector<16x64xf32>
    %cst_5 = arith.constant dense<0.000000e+00> : vector<16xf32>
    %10 = vector.multi_reduction <add>, %9, %cst_5 [1] : vector<16x64xf32> to vector<16xf32>
    %11 = vector.shape_cast %10 : vector<16xf32> to vector<16x1xf32>
    %cst_6 = arith.constant 6.400000e+01 : f32
    %12 = vector.broadcast %cst_6 : f32 to vector<16x1xf32>
    %13 = arith.divf %11, %12 : vector<16x1xf32>
    %cst_7 = arith.constant 9.99999996E-13 : f32
    %14 = vector.broadcast %cst_7 : f32 to vector<16x1xf32>
    %15 = arith.addf %13, %14 : vector<16x1xf32>
    %16 = math.rsqrt %15 : vector<16x1xf32>
    %17 = vector.broadcast %16 : vector<16x1xf32> to vector<16x64xf32>
    %18 = arith.mulf %8, %17 : vector<16x64xf32>
    %19 = vector.broadcast %1 : vector<1x64xf32> to vector<16x64xf32>
    %20 = arith.mulf %18, %19 : vector<16x64xf32>
    %21 = vector.broadcast %2 : vector<1x64xf32> to vector<16x64xf32>
    %22 = arith.addf %20, %21 : vector<16x64xf32>
    %c0_8 = arith.constant 0 : index
    %c0_9 = arith.constant 0 : index
    %23 = vector.load %arg2[%c0_8, %c0_9] : memref<16x16xf32, #tpu.memory_space<vmem>>, vector<16x16xf32>
    %c0_10 = arith.constant 0 : index
    %c0_11 = arith.constant 0 : index
    %c0_12 = arith.constant 0 : index
    %24 = vector.load %arg3[%c0_10, %c0_11, %c0_12] : memref<2x64x448xbf16, #tpu.memory_space<vmem>>, vector<1x64x448xbf16>
    %25 = vector.shape_cast %24 : vector<1x64x448xbf16> to vector<64x448xbf16>
    %26 = arith.truncf %22 : vector<16x64xf32> to vector<16x64xbf16>
    %27 = vector.extract_strided_slice %25 {offsets = [0, 0], sizes = [64, 192], strides = [1, 1]} : vector<64x448xbf16> to vector<64x192xbf16>
    %cst_13 = arith.constant dense<0.000000e+00> : vector<16x192xf32>
    %28 = tpu.matmul %26, %27, %cst_13 {dimension_numbers = #tpu.dot_dimension_numbers<[1], [0], [0], [1], [0, 0, 1, 1], [], []>} : vector<16x64xbf16>, vector<64x192xbf16>, vector<16x192xf32> -> vector<16x192xf32>
    %c2 = arith.constant 2 : index
    %c0_14 = arith.constant 0 : index
    %29 = vector.load %arg5[%c2, %c0_14] : memref<18x192xf32, #tpu.memory_space<vmem>>, vector<1x192xf32>
    %30 = vector.broadcast %29 : vector<1x192xf32> to vector<16x192xf32>
    %31 = arith.addf %28, %30 : vector<16x192xf32>
    %32 = vector.extract_strided_slice %31 {offsets = [0, 0], sizes = [16, 16], strides = [1, 1]} : vector<16x192xf32> to vector<16x16xf32>
    %33 = arith.truncf %32 : vector<16x16xf32> to vector<16x16xbf16>
    %34 = vector.extract_strided_slice %31 {offsets = [0, 64], sizes = [16, 16], strides = [1, 1]} : vector<16x192xf32> to vector<16x16xf32>
    %35 = arith.truncf %34 : vector<16x16xf32> to vector<16x16xbf16>
    %36 = vector.extract_strided_slice %31 {offsets = [0, 128], sizes = [16, 16], strides = [1, 1]} : vector<16x192xf32> to vector<16x16xf32>
    %37 = arith.truncf %36 : vector<16x16xf32> to vector<16x16xbf16>
    %cst_15 = arith.constant dense<0.000000e+00> : vector<16x16xf32>
    %38 = tpu.matmul %33, %35, %cst_15 {dimension_numbers = #tpu.dot_dimension_numbers<[1], [1], [0], [0], [0, 0, 1, 0], [], []>} : vector<16x16xbf16>, vector<16x16xbf16>, vector<16x16xf32> -> vector<16x16xf32>
    %39 = arith.addf %38, %23 : vector<16x16xf32>
    %cst_16 = arith.constant dense<0xFF800000> : vector<16xf32>
    %40 = vector.multi_reduction <maximumf>, %39, %cst_16 [1] : vector<16x16xf32> to vector<16xf32>
    %41 = vector.shape_cast %40 : vector<16xf32> to vector<16x1xf32>
    %42 = vector.broadcast %41 : vector<16x1xf32> to vector<16x16xf32>
    %43 = arith.subf %39, %42 : vector<16x16xf32>
    %44 = math.exp %43 : vector<16x16xf32>
    %cst_17 = arith.constant dense<0.000000e+00> : vector<16xf32>
    %45 = vector.multi_reduction <add>, %44, %cst_17 [1] : vector<16x16xf32> to vector<16xf32>
    %46 = vector.shape_cast %45 : vector<16xf32> to vector<16x1xf32>
    %47 = tpu.reciprocal %46 {approx = true} : vector<16x1xf32> -> vector<16x1xf32>
    %48 = vector.broadcast %47 : vector<16x1xf32> to vector<16x16xf32>
    %49 = arith.mulf %44, %48 : vector<16x16xf32>
    %50 = arith.truncf %49 : vector<16x16xf32> to vector<16x16xbf16>
    %cst_18 = arith.constant dense<0.000000e+00> : vector<16x16xf32>
    %51 = tpu.matmul %50, %37, %cst_18 {dimension_numbers = #tpu.dot_dimension_numbers<[1], [0], [0], [1], [0, 0, 1, 1], [], []>} : vector<16x16xbf16>, vector<16x16xbf16>, vector<16x16xf32> -> vector<16x16xf32>
    %52 = vector.extract_strided_slice %31 {offsets = [0, 16], sizes = [16, 16], strides = [1, 1]} : vector<16x192xf32> to vector<16x16xf32>
    %53 = arith.truncf %52 : vector<16x16xf32> to vector<16x16xbf16>
    %54 = vector.extract_strided_slice %31 {offsets = [0, 80], sizes = [16, 16], strides = [1, 1]} : vector<16x192xf32> to vector<16x16xf32>
    %55 = arith.truncf %54 : vector<16x16xf32> to vector<16x16xbf16>
    %56 = vector.extract_strided_slice %31 {offsets = [0, 144], sizes = [16, 16], strides = [1, 1]} : vector<16x192xf32> to vector<16x16xf32>
    %57 = arith.truncf %56 : vector<16x16xf32> to vector<16x16xbf16>
    %cst_19 = arith.constant dense<0.000000e+00> : vector<16x16xf32>
    %58 = tpu.matmul %53, %55, %cst_19 {dimension_numbers = #tpu.dot_dimension_numbers<[1], [1], [0], [0], [0, 0, 1, 0], [], []>} : vector<16x16xbf16>, vector<16x16xbf16>, vector<16x16xf32> -> vector<16x16xf32>
    %59 = arith.addf %58, %23 : vector<16x16xf32>
    %cst_20 = arith.constant dense<0xFF800000> : vector<16xf32>
    %60 = vector.multi_reduction <maximumf>, %59, %cst_20 [1] : vector<16x16xf32> to vector<16xf32>
    %61 = vector.shape_cast %60 : vector<16xf32> to vector<16x1xf32>
    %62 = vector.broadcast %61 : vector<16x1xf32> to vector<16x16xf32>
    %63 = arith.subf %59, %62 : vector<16x16xf32>
    %64 = math.exp %63 : vector<16x16xf32>
    %cst_21 = arith.constant dense<0.000000e+00> : vector<16xf32>
    %65 = vector.multi_reduction <add>, %64, %cst_21 [1] : vector<16x16xf32> to vector<16xf32>
    %66 = vector.shape_cast %65 : vector<16xf32> to vector<16x1xf32>
    %67 = tpu.reciprocal %66 {approx = true} : vector<16x1xf32> -> vector<16x1xf32>
    %68 = vector.broadcast %67 : vector<16x1xf32> to vector<16x16xf32>
    %69 = arith.mulf %64, %68 : vector<16x16xf32>
    %70 = arith.truncf %69 : vector<16x16xf32> to vector<16x16xbf16>
    %cst_22 = arith.constant dense<0.000000e+00> : vector<16x16xf32>
    %71 = tpu.matmul %70, %57, %cst_22 {dimension_numbers = #tpu.dot_dimension_numbers<[1], [0], [0], [1], [0, 0, 1, 1], [], []>} : vector<16x16xbf16>, vector<16x16xbf16>, vector<16x16xf32> -> vector<16x16xf32>
    %72 = vector.extract_strided_slice %31 {offsets = [0, 32], sizes = [16, 16], strides = [1, 1]} : vector<16x192xf32> to vector<16x16xf32>
    %73 = arith.truncf %72 : vector<16x16xf32> to vector<16x16xbf16>
    %74 = vector.extract_strided_slice %31 {offsets = [0, 96], sizes = [16, 16], strides = [1, 1]} : vector<16x192xf32> to vector<16x16xf32>
    %75 = arith.truncf %74 : vector<16x16xf32> to vector<16x16xbf16>
    %76 = vector.extract_strided_slice %31 {offsets = [0, 160], sizes = [16, 16], strides = [1, 1]} : vector<16x192xf32> to vector<16x16xf32>
    %77 = arith.truncf %76 : vector<16x16xf32> to vector<16x16xbf16>
    %cst_23 = arith.constant dense<0.000000e+00> : vector<16x16xf32>
    %78 = tpu.matmul %73, %75, %cst_23 {dimension_numbers = #tpu.dot_dimension_numbers<[1], [1], [0], [0], [0, 0, 1, 0], [], []>} : vector<16x16xbf16>, vector<16x16xbf16>, vector<16x16xf32> -> vector<16x16xf32>
    %79 = arith.addf %78, %23 : vector<16x16xf32>
    %cst_24 = arith.constant dense<0xFF800000> : vector<16xf32>
    %80 = vector.multi_reduction <maximumf>, %79, %cst_24 [1] : vector<16x16xf32> to vector<16xf32>
    %81 = vector.shape_cast %80 : vector<16xf32> to vector<16x1xf32>
    %82 = vector.broadcast %81 : vector<16x1xf32> to vector<16x16xf32>
    %83 = arith.subf %79, %82 : vector<16x16xf32>
    %84 = math.exp %83 : vector<16x16xf32>
    %cst_25 = arith.constant dense<0.000000e+00> : vector<16xf32>
    %85 = vector.multi_reduction <add>, %84, %cst_25 [1] : vector<16x16xf32> to vector<16xf32>
    %86 = vector.shape_cast %85 : vector<16xf32> to vector<16x1xf32>
    %87 = tpu.reciprocal %86 {approx = true} : vector<16x1xf32> -> vector<16x1xf32>
    %88 = vector.broadcast %87 : vector<16x1xf32> to vector<16x16xf32>
    %89 = arith.mulf %84, %88 : vector<16x16xf32>
    %90 = arith.truncf %89 : vector<16x16xf32> to vector<16x16xbf16>
    %cst_26 = arith.constant dense<0.000000e+00> : vector<16x16xf32>
    %91 = tpu.matmul %90, %77, %cst_26 {dimension_numbers = #tpu.dot_dimension_numbers<[1], [0], [0], [1], [0, 0, 1, 1], [], []>} : vector<16x16xbf16>, vector<16x16xbf16>, vector<16x16xf32> -> vector<16x16xf32>
    %92 = vector.extract_strided_slice %31 {offsets = [0, 48], sizes = [16, 16], strides = [1, 1]} : vector<16x192xf32> to vector<16x16xf32>
    %93 = arith.truncf %92 : vector<16x16xf32> to vector<16x16xbf16>
    %94 = vector.extract_strided_slice %31 {offsets = [0, 112], sizes = [16, 16], strides = [1, 1]} : vector<16x192xf32> to vector<16x16xf32>
    %95 = arith.truncf %94 : vector<16x16xf32> to vector<16x16xbf16>
    %96 = vector.extract_strided_slice %31 {offsets = [0, 176], sizes = [16, 16], strides = [1, 1]} : vector<16x192xf32> to vector<16x16xf32>
    %97 = arith.truncf %96 : vector<16x16xf32> to vector<16x16xbf16>
    %cst_27 = arith.constant dense<0.000000e+00> : vector<16x16xf32>
    %98 = tpu.matmul %93, %95, %cst_27 {dimension_numbers = #tpu.dot_dimension_numbers<[1], [1], [0], [0], [0, 0, 1, 0], [], []>} : vector<16x16xbf16>, vector<16x16xbf16>, vector<16x16xf32> -> vector<16x16xf32>
    %99 = arith.addf %98, %23 : vector<16x16xf32>
    %cst_28 = arith.constant dense<0xFF800000> : vector<16xf32>
    %100 = vector.multi_reduction <maximumf>, %99, %cst_28 [1] : vector<16x16xf32> to vector<16xf32>
    %101 = vector.shape_cast %100 : vector<16xf32> to vector<16x1xf32>
    %102 = vector.broadcast %101 : vector<16x1xf32> to vector<16x16xf32>
    %103 = arith.subf %99, %102 : vector<16x16xf32>
    %104 = math.exp %103 : vector<16x16xf32>
    %cst_29 = arith.constant dense<0.000000e+00> : vector<16xf32>
    %105 = vector.multi_reduction <add>, %104, %cst_29 [1] : vector<16x16xf32> to vector<16xf32>
    %106 = vector.shape_cast %105 : vector<16xf32> to vector<16x1xf32>
    %107 = tpu.reciprocal %106 {approx = true} : vector<16x1xf32> -> vector<16x1xf32>
    %108 = vector.broadcast %107 : vector<16x1xf32> to vector<16x16xf32>
    %109 = arith.mulf %104, %108 : vector<16x16xf32>
    %110 = arith.truncf %109 : vector<16x16xf32> to vector<16x16xbf16>
    %cst_30 = arith.constant dense<0.000000e+00> : vector<16x16xf32>
    %111 = tpu.matmul %110, %97, %cst_30 {dimension_numbers = #tpu.dot_dimension_numbers<[1], [0], [0], [1], [0, 0, 1, 1], [], []>} : vector<16x16xbf16>, vector<16x16xbf16>, vector<16x16xf32> -> vector<16x16xf32>
    %112 = tpu.concatenate %51, %71, %91, %111 in 1 : vector<16x16xf32>, vector<16x16xf32>, vector<16x16xf32>, vector<16x16xf32> -> vector<16x64xf32>
    %113 = arith.truncf %112 : vector<16x64xf32> to vector<16x64xbf16>
    %114 = vector.extract_strided_slice %25 {offsets = [0, 384], sizes = [64, 64], strides = [1, 1]} : vector<64x448xbf16> to vector<64x64xbf16>
    %cst_31 = arith.constant dense<0.000000e+00> : vector<16x64xf32>
    %115 = tpu.matmul %113, %114, %cst_31 {dimension_numbers = #tpu.dot_dimension_numbers<[1], [0], [0], [1], [0, 0, 1, 1], [], []>} : vector<16x64xbf16>, vector<64x64xbf16>, vector<16x64xf32> -> vector<16x64xf32>
    %c3 = arith.constant 3 : index
    %c0_32 = arith.constant 0 : index
    %116 = vector.load %arg5[%c3, %c0_32] : memref<18x192xf32, #tpu.memory_space<vmem>>, vector<1x64xf32>
    %117 = vector.broadcast %116 : vector<1x64xf32> to vector<16x64xf32>
    %118 = arith.addf %115, %117 : vector<16x64xf32>
    %119 = arith.addf %118, %22 : vector<16x64xf32>
    %c6 = arith.constant 6 : index
    %c0_33 = arith.constant 0 : index
    %120 = vector.load %arg5[%c6, %c0_33] : memref<18x192xf32, #tpu.memory_space<vmem>>, vector<1x64xf32>
    %c7 = arith.constant 7 : index
    %c0_34 = arith.constant 0 : index
    %121 = vector.load %arg5[%c7, %c0_34] : memref<18x192xf32, #tpu.memory_space<vmem>>, vector<1x64xf32>
    %cst_35 = arith.constant dense<0.000000e+00> : vector<16xf32>
    %122 = vector.multi_reduction <add>, %119, %cst_35 [1] : vector<16x64xf32> to vector<16xf32>
    %123 = vector.shape_cast %122 : vector<16xf32> to vector<16x1xf32>
    %cst_36 = arith.constant 6.400000e+01 : f32
    %124 = vector.broadcast %cst_36 : f32 to vector<16x1xf32>
    %125 = arith.divf %123, %124 : vector<16x1xf32>
    %126 = vector.broadcast %125 : vector<16x1xf32> to vector<16x64xf32>
    %127 = arith.subf %119, %126 : vector<16x64xf32>
    %128 = arith.mulf %127, %127 : vector<16x64xf32>
    %cst_37 = arith.constant dense<0.000000e+00> : vector<16xf32>
    %129 = vector.multi_reduction <add>, %128, %cst_37 [1] : vector<16x64xf32> to vector<16xf32>
    %130 = vector.shape_cast %129 : vector<16xf32> to vector<16x1xf32>
    %cst_38 = arith.constant 6.400000e+01 : f32
    %131 = vector.broadcast %cst_38 : f32 to vector<16x1xf32>
    %132 = arith.divf %130, %131 : vector<16x1xf32>
    %cst_39 = arith.constant 9.99999996E-13 : f32
    %133 = vector.broadcast %cst_39 : f32 to vector<16x1xf32>
    %134 = arith.addf %132, %133 : vector<16x1xf32>
    %135 = math.rsqrt %134 : vector<16x1xf32>
    %136 = vector.broadcast %135 : vector<16x1xf32> to vector<16x64xf32>
    %137 = arith.mulf %127, %136 : vector<16x64xf32>
    %138 = vector.broadcast %120 : vector<1x64xf32> to vector<16x64xf32>
    %139 = arith.mulf %137, %138 : vector<16x64xf32>
    %140 = vector.broadcast %121 : vector<1x64xf32> to vector<16x64xf32>
    %141 = arith.addf %139, %140 : vector<16x64xf32>
    %142 = arith.truncf %141 : vector<16x64xf32> to vector<16x64xbf16>
    %143 = vector.extract_strided_slice %25 {offsets = [0, 256], sizes = [64, 128], strides = [1, 1]} : vector<64x448xbf16> to vector<64x128xbf16>
    %cst_40 = arith.constant dense<0.000000e+00> : vector<16x128xf32>
    %144 = tpu.matmul %142, %143, %cst_40 {dimension_numbers = #tpu.dot_dimension_numbers<[1], [0], [0], [1], [0, 0, 1, 1], [], []>} : vector<16x64xbf16>, vector<64x128xbf16>, vector<16x128xf32> -> vector<16x128xf32>
    %c4 = arith.constant 4 : index
    %c0_41 = arith.constant 0 : index
    %145 = vector.load %arg5[%c4, %c0_41] : memref<18x192xf32, #tpu.memory_space<vmem>>, vector<1x128xf32>
    %146 = vector.broadcast %145 : vector<1x128xf32> to vector<16x128xf32>
    %147 = arith.addf %144, %146 : vector<16x128xf32>
    %148 = arith.mulf %147, %147 : vector<16x128xf32>
    %149 = arith.mulf %147, %148 : vector<16x128xf32>
    %cst_42 = arith.constant 4.471500e-02 : f32
    %150 = vector.broadcast %cst_42 : f32 to vector<16x128xf32>
    %151 = arith.mulf %150, %149 : vector<16x128xf32>
    %152 = arith.addf %147, %151 : vector<16x128xf32>
    %cst_43 = arith.constant 0.797884583 : f32
    %153 = vector.broadcast %cst_43 : f32 to vector<16x128xf32>
    %154 = arith.mulf %153, %152 : vector<16x128xf32>
    %155 = math.tanh %154 : vector<16x128xf32>
    %cst_44 = arith.constant 1.000000e+00 : f32
    %156 = vector.broadcast %cst_44 : f32 to vector<16x128xf32>
    %157 = arith.addf %156, %155 : vector<16x128xf32>
    %cst_45 = arith.constant 5.000000e-01 : f32
    %158 = vector.broadcast %cst_45 : f32 to vector<16x128xf32>
    %159 = arith.mulf %158, %157 : vector<16x128xf32>
    %160 = arith.mulf %147, %159 : vector<16x128xf32>
    %161 = arith.truncf %160 : vector<16x128xf32> to vector<16x128xbf16>
    %c0_46 = arith.constant 0 : index
    %c0_47 = arith.constant 0 : index
    %c0_48 = arith.constant 0 : index
    %162 = vector.load %arg4[%c0_46, %c0_47, %c0_48] : memref<2x128x64xbf16, #tpu.memory_space<vmem>>, vector<1x128x64xbf16>
    %163 = vector.shape_cast %162 : vector<1x128x64xbf16> to vector<128x64xbf16>
    %cst_49 = arith.constant dense<0.000000e+00> : vector<16x64xf32>
    %164 = tpu.matmul %161, %163, %cst_49 {dimension_numbers = #tpu.dot_dimension_numbers<[1], [0], [0], [1], [0, 0, 1, 1], [], []>} : vector<16x128xbf16>, vector<128x64xbf16>, vector<16x64xf32> -> vector<16x64xf32>
    %c5 = arith.constant 5 : index
    %c0_50 = arith.constant 0 : index
    %165 = vector.load %arg5[%c5, %c0_50] : memref<18x192xf32, #tpu.memory_space<vmem>>, vector<1x64xf32>
    %166 = vector.broadcast %165 : vector<1x64xf32> to vector<16x64xf32>
    %167 = arith.addf %164, %166 : vector<16x64xf32>
    %168 = arith.addf %167, %141 : vector<16x64xf32>
    %c8 = arith.constant 8 : index
    %c0_51 = arith.constant 0 : index
    %169 = vector.load %arg5[%c8, %c0_51] : memref<18x192xf32, #tpu.memory_space<vmem>>, vector<1x64xf32>
    %c9 = arith.constant 9 : index
    %c0_52 = arith.constant 0 : index
    %170 = vector.load %arg5[%c9, %c0_52] : memref<18x192xf32, #tpu.memory_space<vmem>>, vector<1x64xf32>
    %cst_53 = arith.constant dense<0.000000e+00> : vector<16xf32>
    %171 = vector.multi_reduction <add>, %168, %cst_53 [1] : vector<16x64xf32> to vector<16xf32>
    %172 = vector.shape_cast %171 : vector<16xf32> to vector<16x1xf32>
    %cst_54 = arith.constant 6.400000e+01 : f32
    %173 = vector.broadcast %cst_54 : f32 to vector<16x1xf32>
    %174 = arith.divf %172, %173 : vector<16x1xf32>
    %175 = vector.broadcast %174 : vector<16x1xf32> to vector<16x64xf32>
    %176 = arith.subf %168, %175 : vector<16x64xf32>
    %177 = arith.mulf %176, %176 : vector<16x64xf32>
    %cst_55 = arith.constant dense<0.000000e+00> : vector<16xf32>
    %178 = vector.multi_reduction <add>, %177, %cst_55 [1] : vector<16x64xf32> to vector<16xf32>
    %179 = vector.shape_cast %178 : vector<16xf32> to vector<16x1xf32>
    %cst_56 = arith.constant 6.400000e+01 : f32
    %180 = vector.broadcast %cst_56 : f32 to vector<16x1xf32>
    %181 = arith.divf %179, %180 : vector<16x1xf32>
    %cst_57 = arith.constant 9.99999996E-13 : f32
    %182 = vector.broadcast %cst_57 : f32 to vector<16x1xf32>
    %183 = arith.addf %181, %182 : vector<16x1xf32>
    %184 = math.rsqrt %183 : vector<16x1xf32>
    %185 = vector.broadcast %184 : vector<16x1xf32> to vector<16x64xf32>
    %186 = arith.mulf %176, %185 : vector<16x64xf32>
    %187 = vector.broadcast %169 : vector<1x64xf32> to vector<16x64xf32>
    %188 = arith.mulf %186, %187 : vector<16x64xf32>
    %189 = vector.broadcast %170 : vector<1x64xf32> to vector<16x64xf32>
    %190 = arith.addf %188, %189 : vector<16x64xf32>
    %c1_58 = arith.constant 1 : index
    %c0_59 = arith.constant 0 : index
    %c0_60 = arith.constant 0 : index
    %191 = vector.load %arg3[%c1_58, %c0_59, %c0_60] : memref<2x64x448xbf16, #tpu.memory_space<vmem>>, vector<1x64x448xbf16>
    %192 = vector.shape_cast %191 : vector<1x64x448xbf16> to vector<64x448xbf16>
    %193 = arith.truncf %190 : vector<16x64xf32> to vector<16x64xbf16>
    %194 = vector.extract_strided_slice %192 {offsets = [0, 0], sizes = [64, 192], strides = [1, 1]} : vector<64x448xbf16> to vector<64x192xbf16>
    %cst_61 = arith.constant dense<0.000000e+00> : vector<16x192xf32>
    %195 = tpu.matmul %193, %194, %cst_61 {dimension_numbers = #tpu.dot_dimension_numbers<[1], [0], [0], [1], [0, 0, 1, 1], [], []>} : vector<16x64xbf16>, vector<64x192xbf16>, vector<16x192xf32> -> vector<16x192xf32>
    %c10 = arith.constant 10 : index
    %c0_62 = arith.constant 0 : index
    %196 = vector.load %arg5[%c10, %c0_62] : memref<18x192xf32, #tpu.memory_space<vmem>>, vector<1x192xf32>
    %197 = vector.broadcast %196 : vector<1x192xf32> to vector<16x192xf32>
    %198 = arith.addf %195, %197 : vector<16x192xf32>
    %199 = vector.extract_strided_slice %198 {offsets = [0, 0], sizes = [16, 16], strides = [1, 1]} : vector<16x192xf32> to vector<16x16xf32>
    %200 = arith.truncf %199 : vector<16x16xf32> to vector<16x16xbf16>
    %201 = vector.extract_strided_slice %198 {offsets = [0, 64], sizes = [16, 16], strides = [1, 1]} : vector<16x192xf32> to vector<16x16xf32>
    %202 = arith.truncf %201 : vector<16x16xf32> to vector<16x16xbf16>
    %203 = vector.extract_strided_slice %198 {offsets = [0, 128], sizes = [16, 16], strides = [1, 1]} : vector<16x192xf32> to vector<16x16xf32>
    %204 = arith.truncf %203 : vector<16x16xf32> to vector<16x16xbf16>
    %cst_63 = arith.constant dense<0.000000e+00> : vector<16x16xf32>
    %205 = tpu.matmul %200, %202, %cst_63 {dimension_numbers = #tpu.dot_dimension_numbers<[1], [1], [0], [0], [0, 0, 1, 0], [], []>} : vector<16x16xbf16>, vector<16x16xbf16>, vector<16x16xf32> -> vector<16x16xf32>
    %206 = arith.addf %205, %23 : vector<16x16xf32>
    %cst_64 = arith.constant dense<0xFF800000> : vector<16xf32>
    %207 = vector.multi_reduction <maximumf>, %206, %cst_64 [1] : vector<16x16xf32> to vector<16xf32>
    %208 = vector.shape_cast %207 : vector<16xf32> to vector<16x1xf32>
    %209 = vector.broadcast %208 : vector<16x1xf32> to vector<16x16xf32>
    %210 = arith.subf %206, %209 : vector<16x16xf32>
    %211 = math.exp %210 : vector<16x16xf32>
    %cst_65 = arith.constant dense<0.000000e+00> : vector<16xf32>
    %212 = vector.multi_reduction <add>, %211, %cst_65 [1] : vector<16x16xf32> to vector<16xf32>
    %213 = vector.shape_cast %212 : vector<16xf32> to vector<16x1xf32>
    %214 = tpu.reciprocal %213 {approx = true} : vector<16x1xf32> -> vector<16x1xf32>
    %215 = vector.broadcast %214 : vector<16x1xf32> to vector<16x16xf32>
    %216 = arith.mulf %211, %215 : vector<16x16xf32>
    %217 = arith.truncf %216 : vector<16x16xf32> to vector<16x16xbf16>
    %cst_66 = arith.constant dense<0.000000e+00> : vector<16x16xf32>
    %218 = tpu.matmul %217, %204, %cst_66 {dimension_numbers = #tpu.dot_dimension_numbers<[1], [0], [0], [1], [0, 0, 1, 1], [], []>} : vector<16x16xbf16>, vector<16x16xbf16>, vector<16x16xf32> -> vector<16x16xf32>
    %219 = vector.extract_strided_slice %198 {offsets = [0, 16], sizes = [16, 16], strides = [1, 1]} : vector<16x192xf32> to vector<16x16xf32>
    %220 = arith.truncf %219 : vector<16x16xf32> to vector<16x16xbf16>
    %221 = vector.extract_strided_slice %198 {offsets = [0, 80], sizes = [16, 16], strides = [1, 1]} : vector<16x192xf32> to vector<16x16xf32>
    %222 = arith.truncf %221 : vector<16x16xf32> to vector<16x16xbf16>
    %223 = vector.extract_strided_slice %198 {offsets = [0, 144], sizes = [16, 16], strides = [1, 1]} : vector<16x192xf32> to vector<16x16xf32>
    %224 = arith.truncf %223 : vector<16x16xf32> to vector<16x16xbf16>
    %cst_67 = arith.constant dense<0.000000e+00> : vector<16x16xf32>
    %225 = tpu.matmul %220, %222, %cst_67 {dimension_numbers = #tpu.dot_dimension_numbers<[1], [1], [0], [0], [0, 0, 1, 0], [], []>} : vector<16x16xbf16>, vector<16x16xbf16>, vector<16x16xf32> -> vector<16x16xf32>
    %226 = arith.addf %225, %23 : vector<16x16xf32>
    %cst_68 = arith.constant dense<0xFF800000> : vector<16xf32>
    %227 = vector.multi_reduction <maximumf>, %226, %cst_68 [1] : vector<16x16xf32> to vector<16xf32>
    %228 = vector.shape_cast %227 : vector<16xf32> to vector<16x1xf32>
    %229 = vector.broadcast %228 : vector<16x1xf32> to vector<16x16xf32>
    %230 = arith.subf %226, %229 : vector<16x16xf32>
    %231 = math.exp %230 : vector<16x16xf32>
    %cst_69 = arith.constant dense<0.000000e+00> : vector<16xf32>
    %232 = vector.multi_reduction <add>, %231, %cst_69 [1] : vector<16x16xf32> to vector<16xf32>
    %233 = vector.shape_cast %232 : vector<16xf32> to vector<16x1xf32>
    %234 = tpu.reciprocal %233 {approx = true} : vector<16x1xf32> -> vector<16x1xf32>
    %235 = vector.broadcast %234 : vector<16x1xf32> to vector<16x16xf32>
    %236 = arith.mulf %231, %235 : vector<16x16xf32>
    %237 = arith.truncf %236 : vector<16x16xf32> to vector<16x16xbf16>
    %cst_70 = arith.constant dense<0.000000e+00> : vector<16x16xf32>
    %238 = tpu.matmul %237, %224, %cst_70 {dimension_numbers = #tpu.dot_dimension_numbers<[1], [0], [0], [1], [0, 0, 1, 1], [], []>} : vector<16x16xbf16>, vector<16x16xbf16>, vector<16x16xf32> -> vector<16x16xf32>
    %239 = vector.extract_strided_slice %198 {offsets = [0, 32], sizes = [16, 16], strides = [1, 1]} : vector<16x192xf32> to vector<16x16xf32>
    %240 = arith.truncf %239 : vector<16x16xf32> to vector<16x16xbf16>
    %241 = vector.extract_strided_slice %198 {offsets = [0, 96], sizes = [16, 16], strides = [1, 1]} : vector<16x192xf32> to vector<16x16xf32>
    %242 = arith.truncf %241 : vector<16x16xf32> to vector<16x16xbf16>
    %243 = vector.extract_strided_slice %198 {offsets = [0, 160], sizes = [16, 16], strides = [1, 1]} : vector<16x192xf32> to vector<16x16xf32>
    %244 = arith.truncf %243 : vector<16x16xf32> to vector<16x16xbf16>
    %cst_71 = arith.constant dense<0.000000e+00> : vector<16x16xf32>
    %245 = tpu.matmul %240, %242, %cst_71 {dimension_numbers = #tpu.dot_dimension_numbers<[1], [1], [0], [0], [0, 0, 1, 0], [], []>} : vector<16x16xbf16>, vector<16x16xbf16>, vector<16x16xf32> -> vector<16x16xf32>
    %246 = arith.addf %245, %23 : vector<16x16xf32>
    %cst_72 = arith.constant dense<0xFF800000> : vector<16xf32>
    %247 = vector.multi_reduction <maximumf>, %246, %cst_72 [1] : vector<16x16xf32> to vector<16xf32>
    %248 = vector.shape_cast %247 : vector<16xf32> to vector<16x1xf32>
    %249 = vector.broadcast %248 : vector<16x1xf32> to vector<16x16xf32>
    %250 = arith.subf %246, %249 : vector<16x16xf32>
    %251 = math.exp %250 : vector<16x16xf32>
    %cst_73 = arith.constant dense<0.000000e+00> : vector<16xf32>
    %252 = vector.multi_reduction <add>, %251, %cst_73 [1] : vector<16x16xf32> to vector<16xf32>
    %253 = vector.shape_cast %252 : vector<16xf32> to vector<16x1xf32>
    %254 = tpu.reciprocal %253 {approx = true} : vector<16x1xf32> -> vector<16x1xf32>
    %255 = vector.broadcast %254 : vector<16x1xf32> to vector<16x16xf32>
    %256 = arith.mulf %251, %255 : vector<16x16xf32>
    %257 = arith.truncf %256 : vector<16x16xf32> to vector<16x16xbf16>
    %cst_74 = arith.constant dense<0.000000e+00> : vector<16x16xf32>
    %258 = tpu.matmul %257, %244, %cst_74 {dimension_numbers = #tpu.dot_dimension_numbers<[1], [0], [0], [1], [0, 0, 1, 1], [], []>} : vector<16x16xbf16>, vector<16x16xbf16>, vector<16x16xf32> -> vector<16x16xf32>
    %259 = vector.extract_strided_slice %198 {offsets = [0, 48], sizes = [16, 16], strides = [1, 1]} : vector<16x192xf32> to vector<16x16xf32>
    %260 = arith.truncf %259 : vector<16x16xf32> to vector<16x16xbf16>
    %261 = vector.extract_strided_slice %198 {offsets = [0, 112], sizes = [16, 16], strides = [1, 1]} : vector<16x192xf32> to vector<16x16xf32>
    %262 = arith.truncf %261 : vector<16x16xf32> to vector<16x16xbf16>
    %263 = vector.extract_strided_slice %198 {offsets = [0, 176], sizes = [16, 16], strides = [1, 1]} : vector<16x192xf32> to vector<16x16xf32>
    %264 = arith.truncf %263 : vector<16x16xf32> to vector<16x16xbf16>
    %cst_75 = arith.constant dense<0.000000e+00> : vector<16x16xf32>
    %265 = tpu.matmul %260, %262, %cst_75 {dimension_numbers = #tpu.dot_dimension_numbers<[1], [1], [0], [0], [0, 0, 1, 0], [], []>} : vector<16x16xbf16>, vector<16x16xbf16>, vector<16x16xf32> -> vector<16x16xf32>
    %266 = arith.addf %265, %23 : vector<16x16xf32>
    %cst_76 = arith.constant dense<0xFF800000> : vector<16xf32>
    %267 = vector.multi_reduction <maximumf>, %266, %cst_76 [1] : vector<16x16xf32> to vector<16xf32>
    %268 = vector.shape_cast %267 : vector<16xf32> to vector<16x1xf32>
    %269 = vector.broadcast %268 : vector<16x1xf32> to vector<16x16xf32>
    %270 = arith.subf %266, %269 : vector<16x16xf32>
    %271 = math.exp %270 : vector<16x16xf32>
    %cst_77 = arith.constant dense<0.000000e+00> : vector<16xf32>
    %272 = vector.multi_reduction <add>, %271, %cst_77 [1] : vector<16x16xf32> to vector<16xf32>
    %273 = vector.shape_cast %272 : vector<16xf32> to vector<16x1xf32>
    %274 = tpu.reciprocal %273 {approx = true} : vector<16x1xf32> -> vector<16x1xf32>
    %275 = vector.broadcast %274 : vector<16x1xf32> to vector<16x16xf32>
    %276 = arith.mulf %271, %275 : vector<16x16xf32>
    %277 = arith.truncf %276 : vector<16x16xf32> to vector<16x16xbf16>
    %cst_78 = arith.constant dense<0.000000e+00> : vector<16x16xf32>
    %278 = tpu.matmul %277, %264, %cst_78 {dimension_numbers = #tpu.dot_dimension_numbers<[1], [0], [0], [1], [0, 0, 1, 1], [], []>} : vector<16x16xbf16>, vector<16x16xbf16>, vector<16x16xf32> -> vector<16x16xf32>
    %279 = tpu.concatenate %218, %238, %258, %278 in 1 : vector<16x16xf32>, vector<16x16xf32>, vector<16x16xf32>, vector<16x16xf32> -> vector<16x64xf32>
    %280 = arith.truncf %279 : vector<16x64xf32> to vector<16x64xbf16>
    %281 = vector.extract_strided_slice %192 {offsets = [0, 384], sizes = [64, 64], strides = [1, 1]} : vector<64x448xbf16> to vector<64x64xbf16>
    %cst_79 = arith.constant dense<0.000000e+00> : vector<16x64xf32>
    %282 = tpu.matmul %280, %281, %cst_79 {dimension_numbers = #tpu.dot_dimension_numbers<[1], [0], [0], [1], [0, 0, 1, 1], [], []>} : vector<16x64xbf16>, vector<64x64xbf16>, vector<16x64xf32> -> vector<16x64xf32>
    %c11 = arith.constant 11 : index
    %c0_80 = arith.constant 0 : index
    %283 = vector.load %arg5[%c11, %c0_80] : memref<18x192xf32, #tpu.memory_space<vmem>>, vector<1x64xf32>
    %284 = vector.broadcast %283 : vector<1x64xf32> to vector<16x64xf32>
    %285 = arith.addf %282, %284 : vector<16x64xf32>
    %286 = arith.addf %285, %190 : vector<16x64xf32>
    %c14 = arith.constant 14 : index
    %c0_81 = arith.constant 0 : index
    %287 = vector.load %arg5[%c14, %c0_81] : memref<18x192xf32, #tpu.memory_space<vmem>>, vector<1x64xf32>
    %c15 = arith.constant 15 : index
    %c0_82 = arith.constant 0 : index
    %288 = vector.load %arg5[%c15, %c0_82] : memref<18x192xf32, #tpu.memory_space<vmem>>, vector<1x64xf32>
    %cst_83 = arith.constant dense<0.000000e+00> : vector<16xf32>
    %289 = vector.multi_reduction <add>, %286, %cst_83 [1] : vector<16x64xf32> to vector<16xf32>
    %290 = vector.shape_cast %289 : vector<16xf32> to vector<16x1xf32>
    %cst_84 = arith.constant 6.400000e+01 : f32
    %291 = vector.broadcast %cst_84 : f32 to vector<16x1xf32>
    %292 = arith.divf %290, %291 : vector<16x1xf32>
    %293 = vector.broadcast %292 : vector<16x1xf32> to vector<16x64xf32>
    %294 = arith.subf %286, %293 : vector<16x64xf32>
    %295 = arith.mulf %294, %294 : vector<16x64xf32>
    %cst_85 = arith.constant dense<0.000000e+00> : vector<16xf32>
    %296 = vector.multi_reduction <add>, %295, %cst_85 [1] : vector<16x64xf32> to vector<16xf32>
    %297 = vector.shape_cast %296 : vector<16xf32> to vector<16x1xf32>
    %cst_86 = arith.constant 6.400000e+01 : f32
    %298 = vector.broadcast %cst_86 : f32 to vector<16x1xf32>
    %299 = arith.divf %297, %298 : vector<16x1xf32>
    %cst_87 = arith.constant 9.99999996E-13 : f32
    %300 = vector.broadcast %cst_87 : f32 to vector<16x1xf32>
    %301 = arith.addf %299, %300 : vector<16x1xf32>
    %302 = math.rsqrt %301 : vector<16x1xf32>
    %303 = vector.broadcast %302 : vector<16x1xf32> to vector<16x64xf32>
    %304 = arith.mulf %294, %303 : vector<16x64xf32>
    %305 = vector.broadcast %287 : vector<1x64xf32> to vector<16x64xf32>
    %306 = arith.mulf %304, %305 : vector<16x64xf32>
    %307 = vector.broadcast %288 : vector<1x64xf32> to vector<16x64xf32>
    %308 = arith.addf %306, %307 : vector<16x64xf32>
    %309 = arith.truncf %308 : vector<16x64xf32> to vector<16x64xbf16>
    %310 = vector.extract_strided_slice %192 {offsets = [0, 256], sizes = [64, 128], strides = [1, 1]} : vector<64x448xbf16> to vector<64x128xbf16>
    %cst_88 = arith.constant dense<0.000000e+00> : vector<16x128xf32>
    %311 = tpu.matmul %309, %310, %cst_88 {dimension_numbers = #tpu.dot_dimension_numbers<[1], [0], [0], [1], [0, 0, 1, 1], [], []>} : vector<16x64xbf16>, vector<64x128xbf16>, vector<16x128xf32> -> vector<16x128xf32>
    %c12 = arith.constant 12 : index
    %c0_89 = arith.constant 0 : index
    %312 = vector.load %arg5[%c12, %c0_89] : memref<18x192xf32, #tpu.memory_space<vmem>>, vector<1x128xf32>
    %313 = vector.broadcast %312 : vector<1x128xf32> to vector<16x128xf32>
    %314 = arith.addf %311, %313 : vector<16x128xf32>
    %315 = arith.mulf %314, %314 : vector<16x128xf32>
    %316 = arith.mulf %314, %315 : vector<16x128xf32>
    %cst_90 = arith.constant 4.471500e-02 : f32
    %317 = vector.broadcast %cst_90 : f32 to vector<16x128xf32>
    %318 = arith.mulf %317, %316 : vector<16x128xf32>
    %319 = arith.addf %314, %318 : vector<16x128xf32>
    %cst_91 = arith.constant 0.797884583 : f32
    %320 = vector.broadcast %cst_91 : f32 to vector<16x128xf32>
    %321 = arith.mulf %320, %319 : vector<16x128xf32>
    %322 = math.tanh %321 : vector<16x128xf32>
    %cst_92 = arith.constant 1.000000e+00 : f32
    %323 = vector.broadcast %cst_92 : f32 to vector<16x128xf32>
    %324 = arith.addf %323, %322 : vector<16x128xf32>
    %cst_93 = arith.constant 5.000000e-01 : f32
    %325 = vector.broadcast %cst_93 : f32 to vector<16x128xf32>
    %326 = arith.mulf %325, %324 : vector<16x128xf32>
    %327 = arith.mulf %314, %326 : vector<16x128xf32>
    %328 = arith.truncf %327 : vector<16x128xf32> to vector<16x128xbf16>
    %c1_94 = arith.constant 1 : index
    %c0_95 = arith.constant 0 : index
    %c0_96 = arith.constant 0 : index
    %329 = vector.load %arg4[%c1_94, %c0_95, %c0_96] : memref<2x128x64xbf16, #tpu.memory_space<vmem>>, vector<1x128x64xbf16>
    %330 = vector.shape_cast %329 : vector<1x128x64xbf16> to vector<128x64xbf16>
    %cst_97 = arith.constant dense<0.000000e+00> : vector<16x64xf32>
    %331 = tpu.matmul %328, %330, %cst_97 {dimension_numbers = #tpu.dot_dimension_numbers<[1], [0], [0], [1], [0, 0, 1, 1], [], []>} : vector<16x128xbf16>, vector<128x64xbf16>, vector<16x64xf32> -> vector<16x64xf32>
    %c13 = arith.constant 13 : index
    %c0_98 = arith.constant 0 : index
    %332 = vector.load %arg5[%c13, %c0_98] : memref<18x192xf32, #tpu.memory_space<vmem>>, vector<1x64xf32>
    %333 = vector.broadcast %332 : vector<1x64xf32> to vector<16x64xf32>
    %334 = arith.addf %331, %333 : vector<16x64xf32>
    %335 = arith.addf %334, %308 : vector<16x64xf32>
    %c16 = arith.constant 16 : index
    %c0_99 = arith.constant 0 : index
    %336 = vector.load %arg5[%c16, %c0_99] : memref<18x192xf32, #tpu.memory_space<vmem>>, vector<1x64xf32>
    %c17 = arith.constant 17 : index
    %c0_100 = arith.constant 0 : index
    %337 = vector.load %arg5[%c17, %c0_100] : memref<18x192xf32, #tpu.memory_space<vmem>>, vector<1x64xf32>
    %cst_101 = arith.constant dense<0.000000e+00> : vector<16xf32>
    %338 = vector.multi_reduction <add>, %335, %cst_101 [1] : vector<16x64xf32> to vector<16xf32>
    %339 = vector.shape_cast %338 : vector<16xf32> to vector<16x1xf32>
    %cst_102 = arith.constant 6.400000e+01 : f32
    %340 = vector.broadcast %cst_102 : f32 to vector<16x1xf32>
    %341 = arith.divf %339, %340 : vector<16x1xf32>
    %342 = vector.broadcast %341 : vector<16x1xf32> to vector<16x64xf32>
    %343 = arith.subf %335, %342 : vector<16x64xf32>
    %344 = arith.mulf %343, %343 : vector<16x64xf32>
    %cst_103 = arith.constant dense<0.000000e+00> : vector<16xf32>
    %345 = vector.multi_reduction <add>, %344, %cst_103 [1] : vector<16x64xf32> to vector<16xf32>
    %346 = vector.shape_cast %345 : vector<16xf32> to vector<16x1xf32>
    %cst_104 = arith.constant 6.400000e+01 : f32
    %347 = vector.broadcast %cst_104 : f32 to vector<16x1xf32>
    %348 = arith.divf %346, %347 : vector<16x1xf32>
    %cst_105 = arith.constant 9.99999996E-13 : f32
    %349 = vector.broadcast %cst_105 : f32 to vector<16x1xf32>
    %350 = arith.addf %348, %349 : vector<16x1xf32>
    %351 = math.rsqrt %350 : vector<16x1xf32>
    %352 = vector.broadcast %351 : vector<16x1xf32> to vector<16x64xf32>
    %353 = arith.mulf %343, %352 : vector<16x64xf32>
    %354 = vector.broadcast %336 : vector<1x64xf32> to vector<16x64xf32>
    %355 = arith.mulf %353, %354 : vector<16x64xf32>
    %356 = vector.broadcast %337 : vector<1x64xf32> to vector<16x64xf32>
    %357 = arith.addf %355, %356 : vector<16x64xf32>
    %c0_106 = arith.constant 0 : index
    %c0_107 = arith.constant 0 : index
    %358 = vector.load %arg6[%c0_106, %c0_107] : memref<16x64xf32, #tpu.memory_space<vmem>>, vector<16x64xf32>
    tpu.vector_store %arg6[%c0_106, %c0_107], %357 {strides = array<i32>} : memref<16x64xf32, #tpu.memory_space<vmem>>, vector<16x64xf32>,
    return
  }
  func.func @transform_0(%arg0: i32) -> (i32, i32) {
    %c0_i32 = arith.constant 0 : i32
    %c0_i32_0 = arith.constant 0 : i32
    return %arg0, %c0_i32 : i32, i32
  }
  func.func @transform_1(%arg0: i32) -> (i32, i32) {
    %c0_i32 = arith.constant 0 : i32
    %c0_i32_0 = arith.constant 0 : i32
    return %arg0, %c0_i32 : i32, i32
  }
  func.func @transform_2(%arg0: i32) -> (i32, i32, i32) {
    %c0_i32 = arith.constant 0 : i32
    %c0_i32_0 = arith.constant 0 : i32
    %c0_i32_1 = arith.constant 0 : i32
    %c0_i32_2 = arith.constant 0 : i32
    return %c0_i32, %c0_i32_0, %c0_i32_1 : i32, i32, i32
  }
  func.func @transform_3(%arg0: i32) -> (i32, i32, i32) {
    %c0_i32 = arith.constant 0 : i32
    %c0_i32_0 = arith.constant 0 : i32
    %c0_i32_1 = arith.constant 0 : i32
    %c0_i32_2 = arith.constant 0 : i32
    return %c0_i32, %c0_i32_0, %c0_i32_1 : i32, i32, i32
  }
  func.func @transform_4(%arg0: i32) -> (i32, i32) {
    %c0_i32 = arith.constant 0 : i32
    %c0_i32_0 = arith.constant 0 : i32
    %c0_i32_1 = arith.constant 0 : i32
    return %c0_i32, %c0_i32_0 : i32, i32
  }
  func.func @transform_5(%arg0: i32) -> (i32, i32) {
    %c0_i32 = arith.constant 0 : i32
    %c0_i32_0 = arith.constant 0 : i32
    return %arg0, %c0_i32 : i32, i32
  }
}

</mosaic_0001>

<llo_original>
// kernel: _forward_impl.1
$region0: #{_forward_impl.1}
  #allocation0 [shape = 'u32[]', space=smem, size = 0x4, offset = 0x4, fixed_abs, tag = 'smem constant byte address 0x4 - core index']
  #allocation1 [shape = 'u32[72,128]{1,0:T(1,128)}', space=vmem, size = 0x9000, scoped, tag = 'internal scratch']
  %s0 = inlined_call_operand.vmem [shape: f32[32,64], index: 0, kind: input, shape index: {}]
  %s1 = inlined_call_operand.vmem [shape: f32[32,16], index: 1, kind: input, shape index: {}]
  %s2 = inlined_call_operand.vmem [shape: bf16[2,64,448], index: 2, kind: input, shape index: {}]
  %s3 = inlined_call_operand.vmem [shape: bf16[2,128,64], index: 3, kind: input, shape index: {}]
  %s4 = inlined_call_operand.vmem [shape: f32[18,192], index: 4, kind: input, shape index: {}]
  %s5 = inlined_call_operand.hbm [shape: f32[32,64], index: 5, kind: output, shape index: {}]
  %s6 = sld [smem:[#allocation0]]
  $region53: #{_forward_impl.1} parent=0
    _
  %s8 = ssub.s32 1, %s6
  %s9 = scalar_select 0, %s8, %s6
  $region1: #{_forward_impl.1} parent=0
    #allocation2 [shape = 'u8[16384]{0}', space=vmem, size = 0x4000, scoped, tag = 'output window, operand 0']
    #allocation3 [shape = 's32[2]{0}', space=sflag, size = 0x8, scoped, tag = 'scoped memory for _forward_impl.1']
    %10 = vsyncpa [#allocation3], 0
    %s11 = scalar_lea.sflag [#allocation3], 1
    %12 = vsyncpa %s11, 0
    loop: start=0, step=1, limit=4
    $region2: #{_forward_impl.1} parent=1 // loop_pre_header
      _
    $region3: #{_forward_impl.1} parent=1 // loop_header
      %s14 = sphi 0, %s18
      %p15 = scmp.ge.s32.totalorder %s14, 4
      %s24 = sphi 0, %s26
      %s27 = sphi 0, %s24
      %s28 = sphi 0, %s27
      %s44 = sphi 0, %s28
      %s50 = sphi 0, %s52
      %s53 = sphi 0, %s50
      %s54 = sphi 0, %s53
      %s70 = sphi 0, %s54
      %s74 = sphi 0, %s74
      %s76 = sphi 0, %s74
      %s77 = sphi 0, %s76
      %s91 = sphi 0, %s77
      %s95 = sphi 0, %s95
      %s97 = sphi 0, %s95
      %s98 = sphi 0, %s97
      %s112 = sphi 0, %s98
      %s116 = sphi 0, %s116
      %s118 = sphi 0, %s116
      %s119 = sphi 0, %s118
      %s133 = sphi 0, %s119
      %s139 = sphi 0, %s141
      %s142 = sphi 0, %s139
      %s143 = sphi 0, %s142
      %s159 = sphi 0, %s143
    $region4: #{_forward_impl.1} parent=1 // loop_header_branch
      %17 = sbr.rel (%p15) target = $region8
    $region5: #{_forward_impl.1} parent=1 // loop_body
      %s19 = ssub.s32 %s14, 1
      %s20 = ssub.s32 %s14, 2
      %s21 = sadd.s32 %s14, 1
      %s22 = ssub.s32 %s14, %s21
      %p23 = scmp.eq.s32.totalorder %s22, 0
      %s25 = sadd.s32 %s24, 1
      %s26 = scalar_select %p23, %s24, %s25
      %p29 = pneg %p23
      %p30 = scmp.eq.s32.totalorder %s14, 1
      %p31 = por %p29, %p30
      %p32 = scmp.ne.s32.totalorder %s24, %s27
      %p33 = scmp.eq.s32.totalorder %s14, 0
      %p34 = por %p32, %p33
      %p35 = scmp.ne.s32.totalorder %s24, %s27
      %p36 = scmp.eq.s32.totalorder %s19, 1
      %p37 = por %p35, %p36
      %p38 = scmp.ne.s32.totalorder %s27, %s28
      %p39 = scmp.eq.s32.totalorder %s19, 0
      %p40 = por %p38, %p39
      %p41 = scmp.ne.s32.totalorder %s27, %s28
      %p42 = scmp.eq.s32.totalorder %s20, 1
      %p43 = por %p41, %p42
      %p45 = scmp.ne.s32.totalorder %s28, %s44
      %p46 = scmp.eq.s32.totalorder %s20, 0
      %p47 = por %p45, %p46
      %s48 = ssub.s32 %s14, %s21
      %p49 = scmp.eq.s32.totalorder %s48, 0
      %s51 = sadd.s32 %s50, 1
      %s52 = scalar_select %p49, %s50, %s51
      %p55 = pneg %p49
      %p56 = scmp.eq.s32.totalorder %s14, 1
      %p57 = por %p55, %p56
      %p58 = scmp.ne.s32.totalorder %s50, %s53
      %p59 = scmp.eq.s32.totalorder %s14, 0
      %p60 = por %p58, %p59
      %p61 = scmp.ne.s32.totalorder %s50, %s53
      %p62 = scmp.eq.s32.totalorder %s19, 1
      %p63 = por %p61, %p62
      %p64 = scmp.ne.s32.totalorder %s53, %s54
      %p65 = scmp.eq.s32.totalorder %s19, 0
      %p66 = por %p64, %p65
      %p67 = scmp.ne.s32.totalorder %s53, %s54
      %p68 = scmp.eq.s32.totalorder %s20, 1
      %p69 = por %p67, %p68
      %p71 = scmp.ne.s32.totalorder %s54, %s70
      %p72 = scmp.eq.s32.totalorder %s20, 0
      %p73 = por %p71, %p72
      %s75 = sadd.s32 %s74, 1
      %p78 = scmp.eq.s32.totalorder %s14, 1
      %p79 = scmp.ne.s32.totalorder %s74, %s76
      %p80 = scmp.eq.s32.totalorder %s14, 0
      %p81 = por %p79, %p80
      %p82 = scmp.ne.s32.totalorder %s74, %s76
      %p83 = scmp.eq.s32.totalorder %s19, 1
      %p84 = por %p82, %p83
      %p85 = scmp.ne.s32.totalorder %s76, %s77
      %p86 = scmp.eq.s32.totalorder %s19, 0
      %p87 = por %p85, %p86
      %p88 = scmp.ne.s32.totalorder %s76, %s77
      %p89 = scmp.eq.s32.totalorder %s20, 1
      %p90 = por %p88, %p89
      %p92 = scmp.ne.s32.totalorder %s77, %s91
      %p93 = scmp.eq.s32.totalorder %s20, 0
      %p94 = por %p92, %p93
      %s96 = sadd.s32 %s95, 1
      %p99 = scmp.eq.s32.totalorder %s14, 1
      %p100 = scmp.ne.s32.totalorder %s95, %s97
      %p101 = scmp.eq.s32.totalorder %s14, 0
      %p102 = por %p100, %p101
      %p103 = scmp.ne.s32.totalorder %s95, %s97
      %p104 = scmp.eq.s32.totalorder %s19, 1
      %p105 = por %p103, %p104
      %p106 = scmp.ne.s32.totalorder %s97, %s98
      %p107 = scmp.eq.s32.totalorder %s19, 0
      %p108 = por %p106, %p107
      %p109 = scmp.ne.s32.totalorder %s97, %s98
      %p110 = scmp.eq.s32.totalorder %s20, 1
      %p111 = por %p109, %p110
      %p113 = scmp.ne.s32.totalorder %s98, %s112
      %p114 = scmp.eq.s32.totalorder %s20, 0
      %p115 = por %p113, %p114
      %s117 = sadd.s32 %s116, 1
      %p120 = scmp.eq.s32.totalorder %s14, 1
      %p121 = scmp.ne.s32.totalorder %s116, %s118
      %p122 = scmp.eq.s32.totalorder %s14, 0
      %p123 = por %p121, %p122
      %p124 = scmp.ne.s32.totalorder %s116, %s118
      %p125 = scmp.eq.s32.totalorder %s19, 1
      %p126 = por %p124, %p125
      %p127 = scmp.ne.s32.totalorder %s118, %s119
      %p128 = scmp.eq.s32.totalorder %s19, 0
      %p129 = por %p127, %p128
      %p130 = scmp.ne.s32.totalorder %s118, %s119
      %p131 = scmp.eq.s32.totalorder %s20, 1
      %p132 = por %p130, %p131
      %p134 = scmp.ne.s32.totalorder %s119, %s133
      %p135 = scmp.eq.s32.totalorder %s20, 0
      %p136 = por %p134, %p135
      %s137 = ssub.s32 %s14, %s21
      %p138 = scmp.eq.s32.totalorder %s137, 0
      %s140 = sadd.s32 %s139, 1
      %s141 = scalar_select %p138, %s139, %s140
      %p144 = pneg %p138
      %p145 = scmp.eq.s32.totalorder %s14, 1
      %p146 = por %p144, %p145
      %p147 = scmp.ne.s32.totalorder %s139, %s142
      %p148 = scmp.eq.s32.totalorder %s14, 0
      %p149 = por %p147, %p148
      %p150 = scmp.ne.s32.totalorder %s139, %s142
      %p151 = scmp.eq.s32.totalorder %s19, 1
      %p152 = por %p150, %p151
      %p153 = scmp.ne.s32.totalorder %s142, %s143
      %p154 = scmp.eq.s32.totalorder %s19, 0
      %p155 = por %p153, %p154
      %p156 = scmp.ne.s32.totalorder %s142, %s143
      %p157 = scmp.eq.s32.totalorder %s20, 1
      %p158 = por %p156, %p157
      %p160 = scmp.ne.s32.totalorder %s143, %s159
      %p161 = scmp.eq.s32.totalorder %s20, 0
      %p162 = por %p160, %p161
      %p163 = scmp.le.s32.totalorder 1, %s14
      %p164 = scmp.lt.s32.totalorder %s14, 3
      %p165 = pnand %p163, %p164
      %p166 = pneg %p165
      // Predicated region
      $region9: #{_forward_impl.1} parent=5 // pred_check
        _
      $region10: #{_forward_impl.1} parent=5 // pred_check_branch
        %168 = sbr.rel (%p165) target = $region12
      $region11: #{_forward_impl.1} parent=5 // pred_region
        %s169 = ssub.s32 %s14, 1
        // Predicated region
        $region13: #{_forward_impl.1} parent=11 // pred_check
          %p170 = pneg %p87
        $region14: #{_forward_impl.1} parent=11 // pred_check_branch
          %172 = sbr.rel (%p170) target = $region16
        $region15: #{_forward_impl.1} parent=11 // pred_region
          _
        $region16: #{_forward_impl.1} parent=11 // pred_fallthru
          _
        // Predicated region
        $region17: #{_forward_impl.1} parent=11 // pred_check
          %p173 = pneg %p108
        $region18: #{_forward_impl.1} parent=11 // pred_check_branch
          %175 = sbr.rel (%p173) target = $region20
        $region19: #{_forward_impl.1} parent=11 // pred_region
          _
        $region20: #{_forward_impl.1} parent=11 // pred_fallthru
          _
        // Predicated region
        $region21: #{_forward_impl.1} parent=11 // pred_check
          %p176 = pneg %p129
        $region22: #{_forward_impl.1} parent=11 // pred_check_branch
          %178 = sbr.rel (%p176) target = $region24
        $region23: #{_forward_impl.1} parent=11 // pred_region
          _
        $region24: #{_forward_impl.1} parent=11 // pred_fallthru
          _
      $region12: #{_forward_impl.1} parent=5 // pred_fallthru
        _
      %p179 = scmp.lt.s32.totalorder %s14, 2
      // Predicated region
      $region25: #{_forward_impl.1} parent=5 // pred_check
        %p180 = pneg %p179
      $region26: #{_forward_impl.1} parent=5 // pred_check_branch
        %182 = sbr.rel (%p180) target = $region28
      $region27: #{_forward_impl.1} parent=5 // pred_region
        // Predicated region
        $region29: #{_forward_impl.1} parent=27 // pred_check
          %p183 = pneg %p34
        $region30: #{_forward_impl.1} parent=27 // pred_check_branch
          %185 = sbr.rel (%p183) target = $region32
        $region31: #{_forward_impl.1} parent=27 // pred_region
          %s186 = smul.u32 2, %s14
          %p187 = scmp.lt.s32.totalorder %s186, 3
          %s188 = scalar_select %p187, %s186, 3
          %s189 = smul.addr %s188, 8
          %s190 = scalar_lea.vmem %s0, %s189
          %s191 = smul.u32 2, %s14
        $region32: #{_forward_impl.1} parent=27 // pred_fallthru
          _
        // Predicated region
        $region33: #{_forward_impl.1} parent=27 // pred_check
          %p192 = pneg %p60
        $region34: #{_forward_impl.1} parent=27 // pred_check_branch
          %194 = sbr.rel (%p192) target = $region36
        $region35: #{_forward_impl.1} parent=27 // pred_region
          %s195 = smul.u32 2, %s14
          %p196 = scmp.lt.s32.totalorder %s195, 3
          %s197 = scalar_select %p196, %s195, 3
          %s198 = smul.addr %s197, 8
          %s199 = scalar_lea.vmem %s1, %s198
          %s200 = smul.u32 2, %s14
        $region36: #{_forward_impl.1} parent=27 // pred_fallthru
          _
      $region28: #{_forward_impl.1} parent=5 // pred_fallthru
        _
      %p201 = scmp.le.s32.totalorder 1, %s14
      %p202 = scmp.lt.s32.totalorder %s14, 3
      %p203 = pnand %p201, %p202
      %p204 = pneg %p203
      // Predicated region
      $region37: #{_forward_impl.1} parent=5 // pred_check
        _
      $region38: #{_forward_impl.1} parent=5 // pred_check_branch
        %206 = sbr.rel (%p203) target = $region40
      $region39: #{_forward_impl.1} parent=5 // pred_region
        %s207 = ssub.s32 %s14, 1
        %s208 = smul.u32 2, %s19
        %p209 = scmp.lt.s32.totalorder %s208, 3
        %s210 = scalar_select %p209, %s208, 3
        %s211 = smul.addr %s210, 8
        %s212 = scalar_lea.vmem %s0, %s211
        %p213 = pneg %p40
        %p214 = pneg %p37
        %s215 = smul.u32 2, %s19
        %p216 = scmp.lt.s32.totalorder %s215, 3
        %s217 = scalar_select %p216, %s215, 3
        %s218 = smul.addr %s217, 8
        %s219 = scalar_lea.vmem %s1, %s218
        %p220 = pneg %p66
        %p221 = pneg %p63
        %p222 = pneg %p87
        %p223 = pneg %p84
        %p224 = pneg %p108
        %p225 = pneg %p105
        %p226 = pneg %p129
        %p227 = pneg %p126
        %p228 = pneg %p155
        %p229 = pneg %p152
        %s230 = sand.u32 %s142, 1
        %s231 = scalar_lea.sflag [#allocation3], %s230
        %s232 = sand.u32 %s142, 1
        %s233 = smul.addr %s232, 16
        %s234 = scalar_lea.vmem [#allocation2], %s233
        %s235 = smul.u32 2, %s19
        %p236 = scmp.lt.s32.totalorder %s235, 3
        %s237 = scalar_select %p236, %s235, 3
        %s238 = smul.addr %s237, 8
        %s239 = scalar_lea.vmem %s0, %s238
        %s240 = smul.u32 2, %s19
        %s241 = smul.u32 2, %s19
        %p242 = scmp.lt.s32.totalorder %s241, 3
        %s243 = scalar_select %p242, %s241, 3
        %s244 = smul.addr %s243, 8
        %s245 = scalar_lea.vmem %s1, %s244
        %s246 = smul.u32 2, %s19
        %s247 = smul.u32 2, %s19
        %v249 = vld [vmem:[%s239] sm:$0xff]
        %v250 = vld [vmem:[%s239 + $0x8] sm:$0xff]
        %v251 = vld [vmem:[%s4] ss:$0 sm:$0xff]
        %v252 = vld [vmem:[%s4 + $0x1] ss:$0 sm:$0xff]
        %vm253 = vcmask 523264
        %v254 = vsel %vm253, %v249, 0.0
        %255 = vadd.xlane.f32.xlu0 %v254
        %v256 = vpop.xlane.xlu0 %255
        %v257 = vsel %vm253, %v250, 0.0
        %258 = vadd.xlane.f32.xlu0 %v257
        %v259 = vpop.xlane.xlu0 %258
        %v260 = vrcp.pop 64.0
        %v261 = vmul.f32 64.0, %v260
        %v262 = vsub.f32 1.0, %v261
        %v263 = vmul.f32 %v260, %v262
        %v264 = vadd.f32 %v260, %v263
        %vm265 = vweird.f32 %v260
        %v266 = vsel %vm265, %v260, %v264
        %v267 = vmul.f32 %v256, %v266
        %v268 = vmul.f32 %v259, %v266
        %v269 = vsub.f32 %v249, %v267
        %v270 = vsub.f32 %v250, %v268
        %v271 = vmul.f32 %v269, %v269
        %v272 = vmul.f32 %v270, %v270
        %v273 = vsel %vm253, %v271, 0.0
        %274 = vadd.xlane.f32.xlu0 %v273
        %v275 = vpop.xlane.xlu0 %274
        %v276 = vsel %vm253, %v272, 0.0
        %277 = vadd.xlane.f32.xlu0 %v276
        %v278 = vpop.xlane.xlu0 %277
        %v279 = vmul.f32 %v275, %v266
        %v280 = vmul.f32 %v278, %v266
        %v281 = vadd.f32 %v279, 1e-12
        %v282 = vadd.f32 %v280, 1e-12
        %v283 = vrsqrt.pop %v281
        %v284 = vmul.f32 %v283, %v281
        %v285 = vmul.f32 %v284, %v283
        %v286 = vmul.f32 0.5, %v285
        %v287 = vsub.f32 1.5, %v286
        %v288 = vmul.f32 %v283, %v287
        %vm289 = vweird.f32 %v281
        %vm290 = vweird.f32 %v283
        %vm291 = vmor %vm289, %vm290
        %v292 = vsel %vm291, %v283, %v288
        %v293 = vrsqrt.pop %v282
        %v294 = vmul.f32 %v293, %v282
        %v295 = vmul.f32 %v294, %v293
        %v296 = vmul.f32 0.5, %v295
        %v297 = vsub.f32 1.5, %v296
        %v298 = vmul.f32 %v293, %v297
        %vm299 = vweird.f32 %v282
        %vm300 = vweird.f32 %v293
        %vm301 = vmor %vm299, %vm300
        %v302 = vsel %vm301, %v293, %v298
        %v303 = vmul.f32 %v269, %v292
        %v304 = vmul.f32 %v270, %v302
        %v305 = vmul.f32 %v303, %v251
        %v306 = vmul.f32 %v304, %v251
        %v307 = vadd.f32 %v305, %v252
        %v308 = vadd.f32 %v306, %v252
        %v309 = vld [vmem:[%s245] sm:$0xff]
        %v310 = vld [vmem:[%s245 + $0x8] sm:$0xff]
        %v311 = vld [vmem:[%s2] sm:$0xff]
        %v312 = vld [vmem:[%s2 + $0x8] sm:$0xff]
        %v313 = vld [vmem:[%s2 + $0x10] sm:$0xff]
        %v314 = vld [vmem:[%s2 + $0x18] sm:$0xff]
        %v315 = vld [vmem:[%s2 + $0x20] sm:$0xff]
        %v316 = vld [vmem:[%s2 + $0x28] sm:$0xff]
        %v317 = vld [vmem:[%s2 + $0x30] sm:$0xff]
        %v318 = vld [vmem:[%s2 + $0x38] sm:$0xff]
        %v319 = vld [vmem:[%s2 + $0x40] sm:$0xff]
        %v320 = vld [vmem:[%s2 + $0x48] sm:$0xff]
        %v321 = vld [vmem:[%s2 + $0x50] sm:$0xff]
        %v322 = vld [vmem:[%s2 + $0x58] sm:$0xff]
        %v323 = vld [vmem:[%s2 + $0x60] sm:$0xff]
        %v324 = vld [vmem:[%s2 + $0x68] sm:$0xff]
        %v325 = vld [vmem:[%s2 + $0x70] sm:$0xff]
        %v326 = vld [vmem:[%s2 + $0x78] sm:$0xff]
        %v327 = vpack.c.bf16 %v308, %v307
        %s328 = scalar_lea.vmem %s4, 2
        %v329 = vld [vmem:[%s328] ss:$8 sm:$0x3]
        %v331 = vperm.slane %v329, 0
        %v332 = vperm.slane %v329, 1
        %v343 = vunpack.c.l.b16 %v311
        %v344 = vunpack.c.h.b16 %v311
        %v345 = vunpack.c.l.b16 %v313
        %v346 = vunpack.c.h.b16 %v313
        %v347 = vunpack.c.l.b16 %v315
        %v348 = vunpack.c.h.b16 %v315
        %v349 = vunpack.c.l.b16 %v317
        %v350 = vunpack.c.h.b16 %v317
        %v351 = vunpack.c.l.b16 %v319
        %v352 = vunpack.c.h.b16 %v319
        %v353 = vunpack.c.l.b16 %v321
        %v354 = vunpack.c.h.b16 %v321
        %v355 = vunpack.c.l.b16 %v323
        %v356 = vunpack.c.h.b16 %v323
        %v357 = vunpack.c.l.b16 %v325
        %v358 = vunpack.c.h.b16 %v325
        %v359 = vpack.c.b16 %v345, %v343
        %v360 = vpack.c.b16 %v346, %v344
        %v361 = vpack.c.b16 %v349, %v347
        %v362 = vpack.c.b16 %v350, %v348
        %v363 = vpack.c.b16 %v353, %v351
        %v364 = vpack.c.b16 %v354, %v352
        %v365 = vpack.c.b16 %v357, %v355
        %v366 = vpack.c.b16 %v358, %v356
        %v376 = vsel %vm253, %v327, 0
        %378 = vmatpush.bf16.msra.mxu0 0
        %379 = vmatpush.bf16.msra.mxu0 0
        %380 = vmatpush.bf16.msra.mxu0 0
        %381 = vmatpush.bf16.msra.mxu0 0
        %382 = vmatpush.bf16.msra.mxu0 %v365
        %383 = vmatpush.bf16.msra.mxu0 %v363
        %384 = vmatpush.bf16.msra.mxu0 %v361
        %385 = vmatpush.bf16.msra.mxu0 %v359
        %386 = vmatmul.bf16.gmra.mxu0 %v376
        %v387 = vpop.f32.mrf.mxu0
        %v388 = vadd.f32 %v331, %v387
        %v389 = vpop.f32.mrf.mxu0
        %v390 = vadd.f32 %v331, %v389
        %391 = vdwg.mxu0
        %392 = vmatpush.bf16.msra.mxu0 0
        %393 = vmatpush.bf16.msra.mxu0 0
        %394 = vmatpush.bf16.msra.mxu0 0
        %395 = vmatpush.bf16.msra.mxu0 0
        %396 = vmatpush.bf16.msra.mxu0 %v366
        %397 = vmatpush.bf16.msra.mxu0 %v364
        %398 = vmatpush.bf16.msra.mxu0 %v362
        %399 = vmatpush.bf16.msra.mxu0 %v360
        %400 = vmatmul.bf16.gmra.mxu0 %v376
        %v401 = vpop.f32.mrf.mxu0
        %v402 = vadd.f32 %v332, %v401
        %v403 = vpop.f32.mrf.mxu0
        %v404 = vadd.f32 %v332, %v403
        %405 = vdwg.mxu0
        %v406 = vpack.c.bf16 %v390, %v388
        %v407 = vpack.c.bf16 %v404, %v402
        %409 = vrot.lane.b32.xlu0 %v406, 64
        %v410 = vpop.permute.xlu0 %409
        %vm411 = vcmask 130048
        %v413 = vsel %vm411, %v406, 0
        %v416 = vsel %vm411, %v410, 0
        %418 = vmatpush.bf16.xpose.msra.mxu0 0
        %419 = vmatpush.bf16.xpose.msra.mxu0 0
        %420 = vmatpush.bf16.xpose.msra.mxu0 0
        %421 = vmatpush.bf16.xpose.msra.mxu0 0
        %422 = vmatpush.bf16.xpose.msra.mxu0 0
        %423 = vmatpush.bf16.xpose.msra.mxu0 0
        %424 = vmatpush.bf16.xpose.msra.mxu0 0
        %425 = vmatpush.bf16.xpose.msra.mxu0 %v416
        %426 = vmatmul.bf16.gmra.mxu0 %v413
        %v427 = vpop.f32.mrf.mxu0
        %v428 = vadd.f32 %v309, %v427
        %v429 = vpop.f32.mrf.mxu0
        %v430 = vadd.f32 %v310, %v429
        %431 = vdwg.mxu0
        %v432 = vsel %vm411, %v428, -inf
        %433 = vmax.xlane.f32.xlu0 %v432
        %v434 = vpop.xlane.xlu0 %433
        %v435 = vsel %vm411, %v430, -inf
        %436 = vmax.xlane.f32.xlu0 %v435
        %v437 = vpop.xlane.xlu0 %436
        %v438 = vsub.f32 %v428, %v434
        %v439 = vsub.f32 %v430, %v437
        %v440 = vmul.f32 %v438, 1.442695
        %v441 = vpow.pop %v440
        %v442 = vmul.f32 %v439, 1.442695
        %v443 = vpow.pop %v442
        %v444 = vsel %vm411, %v441, 0.0
        %445 = vadd.xlane.f32.xlu0 %v444
        %v446 = vpop.xlane.xlu0 %445
        %v447 = vsel %vm411, %v443, 0.0
        %448 = vadd.xlane.f32.xlu0 %v447
        %v449 = vpop.xlane.xlu0 %448
        %v450 = vrcp.pop %v446
        %v451 = vrcp.pop %v449
        %v452 = vmul.f32 %v441, %v450
        %v453 = vmul.f32 %v443, %v451
        %v454 = vpack.c.bf16 %v453, %v452
        %v456 = vsel %vm411, %v454, 0
        %458 = vmatpush.bf16.msra.mxu0 0
        %459 = vmatpush.bf16.msra.mxu0 0
        %460 = vmatpush.bf16.msra.mxu0 0
        %461 = vmatpush.bf16.msra.mxu0 0
        %462 = vmatpush.bf16.msra.mxu0 0
        %463 = vmatpush.bf16.msra.mxu0 0
        %464 = vmatpush.bf16.msra.mxu0 0
        %465 = vmatpush.bf16.msra.mxu0 %v407
        %466 = vmatmul.bf16.gmra.mxu0 %v456
        %v467 = vpop.f32.mrf.mxu0
        %v468 = vadd.f32 0.0, %v467
        %v469 = vpop.f32.mrf.mxu0
        %v470 = vadd.f32 0.0, %v469
        %471 = vdwg.mxu0
        %472 = vrot.lane.b32.xlu0 %v406, 112
        %v473 = vpop.permute.xlu0 %472
        %474 = vrot.lane.b32.xlu0 %v406, 48
        %v475 = vpop.permute.xlu0 %474
        %v477 = vsel %vm411, %v473, 0
        %v480 = vsel %vm411, %v475, 0
        %482 = vmatpush.bf16.xpose.msra.mxu0 0
        %483 = vmatpush.bf16.xpose.msra.mxu0 0
        %484 = vmatpush.bf16.xpose.msra.mxu0 0
        %485 = vmatpush.bf16.xpose.msra.mxu0 0
        %486 = vmatpush.bf16.xpose.msra.mxu0 0
        %487 = vmatpush.bf16.xpose.msra.mxu0 0
        %488 = vmatpush.bf16.xpose.msra.mxu0 0
        %489 = vmatpush.bf16.xpose.msra.mxu0 %v480
        %490 = vmatmul.bf16.gmra.mxu0 %v477
        %v491 = vpop.f32.mrf.mxu0
        %v492 = vadd.f32 %v309, %v491
        %v493 = vpop.f32.mrf.mxu0
        %v494 = vadd.f32 %v310, %v493
        %495 = vdwg.mxu0
        %v496 = vsel %vm411, %v492, -inf
        %497 = vmax.xlane.f32.xlu0 %v496
        %v498 = vpop.xlane.xlu0 %497
        %v499 = vsel %vm411, %v494, -inf
        %500 = vmax.xlane.f32.xlu0 %v499
        %v501 = vpop.xlane.xlu0 %500
        %v502 = vsub.f32 %v492, %v498
        %v503 = vsub.f32 %v494, %v501
        %v504 = vmul.f32 %v502, 1.442695
        %v505 = vpow.pop %v504
        %v506 = vmul.f32 %v503, 1.442695
        %v507 = vpow.pop %v506
        %v508 = vsel %vm411, %v505, 0.0
        %509 = vadd.xlane.f32.xlu0 %v508
        %v510 = vpop.xlane.xlu0 %509
        %v511 = vsel %vm411, %v507, 0.0
        %512 = vadd.xlane.f32.xlu0 %v511
        %v513 = vpop.xlane.xlu0 %512
        %v514 = vrcp.pop %v510
        %v515 = vrcp.pop %v513
        %v516 = vmul.f32 %v505, %v514
        %v517 = vmul.f32 %v507, %v515
        %v518 = vpack.c.bf16 %v517, %v516
        %520 = vrot.lane.b32.xlu0 %v407, 112
        %v521 = vpop.permute.xlu0 %520
        %v524 = vsel %vm411, %v518, 0
        %526 = vmatpush.bf16.msra.mxu0 0
        %527 = vmatpush.bf16.msra.mxu0 0
        %528 = vmatpush.bf16.msra.mxu0 0
        %529 = vmatpush.bf16.msra.mxu0 0
        %530 = vmatpush.bf16.msra.mxu0 0
        %531 = vmatpush.bf16.msra.mxu0 0
        %532 = vmatpush.bf16.msra.mxu0 0
        %533 = vmatpush.bf16.msra.mxu0 %v521
        %534 = vmatmul.bf16.gmra.mxu0 %v524
        %v535 = vpop.f32.mrf.mxu0
        %v536 = vadd.f32 0.0, %v535
        %v537 = vpop.f32.mrf.mxu0
        %v538 = vadd.f32 0.0, %v537
        %539 = vdwg.mxu0
        %540 = vrot.lane.b32.xlu0 %v406, 96
        %v541 = vpop.permute.xlu0 %540
        %542 = vrot.lane.b32.xlu0 %v406, 32
        %v543 = vpop.permute.xlu0 %542
        %v545 = vsel %vm411, %v541, 0
        %v548 = vsel %vm411, %v543, 0
        %550 = vmatpush.bf16.xpose.msra.mxu0 0
        %551 = vmatpush.bf16.xpose.msra.mxu0 0
        %552 = vmatpush.bf16.xpose.msra.mxu0 0
        %553 = vmatpush.bf16.xpose.msra.mxu0 0
        %554 = vmatpush.bf16.xpose.msra.mxu0 0
        %555 = vmatpush.bf16.xpose.msra.mxu0 0
        %556 = vmatpush.bf16.xpose.msra.mxu0 0
        %557 = vmatpush.bf16.xpose.msra.mxu0 %v548
        %558 = vmatmul.bf16.gmra.mxu0 %v545
        %v559 = vpop.f32.mrf.mxu0
        %v560 = vadd.f32 %v309, %v559
        %v561 = vpop.f32.mrf.mxu0
        %v562 = vadd.f32 %v310, %v561
        %563 = vdwg.mxu0
        %v564 = vsel %vm411, %v560, -inf
        %565 = vmax.xlane.f32.xlu0 %v564
        %v566 = vpop.xlane.xlu0 %565
        %v567 = vsel %vm411, %v562, -inf
        %568 = vmax.xlane.f32.xlu0 %v567
        %v569 = vpop.xlane.xlu0 %568
        %v570 = vsub.f32 %v560, %v566
        %v571 = vsub.f32 %v562, %v569
        %v572 = vmul.f32 %v570, 1.442695
        %v573 = vpow.pop %v572
        %v574 = vmul.f32 %v571, 1.442695
        %v575 = vpow.pop %v574
        %v576 = vsel %vm411, %v573, 0.0
        %577 = vadd.xlane.f32.xlu0 %v576
        %v578 = vpop.xlane.xlu0 %577
        %v579 = vsel %vm411, %v575, 0.0
        %580 = vadd.xlane.f32.xlu0 %v579
        %v581 = vpop.xlane.xlu0 %580
        %v582 = vrcp.pop %v578
        %v583 = vrcp.pop %v581
        %v584 = vmul.f32 %v573, %v582
        %v585 = vmul.f32 %v575, %v583
        %v586 = vpack.c.bf16 %v585, %v584
        %587 = vrot.lane.b32.xlu0 %v407, 96
        %v588 = vpop.permute.xlu0 %587
        %v591 = vsel %vm411, %v586, 0
        %593 = vmatpush.bf16.msra.mxu0 0
        %594 = vmatpush.bf16.msra.mxu0 0
        %595 = vmatpush.bf16.msra.mxu0 0
        %596 = vmatpush.bf16.msra.mxu0 0
        %597 = vmatpush.bf16.msra.mxu0 0
        %598 = vmatpush.bf16.msra.mxu0 0
        %599 = vmatpush.bf16.msra.mxu0 0
        %600 = vmatpush.bf16.msra.mxu0 %v588
        %601 = vmatmul.bf16.gmra.mxu0 %v591
        %v602 = vpop.f32.mrf.mxu0
        %v603 = vadd.f32 0.0, %v602
        %v604 = vpop.f32.mrf.mxu0
        %v605 = vadd.f32 0.0, %v604
        %606 = vdwg.mxu0
        %607 = vrot.lane.b32.xlu0 %v406, 80
        %v608 = vpop.permute.xlu0 %607
        %609 = vrot.lane.b32.xlu0 %v406, 16
        %v610 = vpop.permute.xlu0 %609
        %v612 = vsel %vm411, %v608, 0
        %v615 = vsel %vm411, %v610, 0
        %617 = vmatpush.bf16.xpose.msra.mxu0 0
        %618 = vmatpush.bf16.xpose.msra.mxu0 0
        %619 = vmatpush.bf16.xpose.msra.mxu0 0
        %620 = vmatpush.bf16.xpose.msra.mxu0 0
        %621 = vmatpush.bf16.xpose.msra.mxu0 0
        %622 = vmatpush.bf16.xpose.msra.mxu0 0
        %623 = vmatpush.bf16.xpose.msra.mxu0 0
        %624 = vmatpush.bf16.xpose.msra.mxu0 %v615
        %625 = vmatmul.bf16.gmra.mxu0 %v612
        %v626 = vpop.f32.mrf.mxu0
        %v627 = vadd.f32 %v309, %v626
        %v628 = vpop.f32.mrf.mxu0
        %v629 = vadd.f32 %v310, %v628
        %630 = vdwg.mxu0
        %v631 = vsel %vm411, %v627, -inf
        %632 = vmax.xlane.f32.xlu0 %v631
        %v633 = vpop.xlane.xlu0 %632
        %v634 = vsel %vm411, %v629, -inf
        %635 = vmax.xlane.f32.xlu0 %v634
        %v636 = vpop.xlane.xlu0 %635
        %v637 = vsub.f32 %v627, %v633
        %v638 = vsub.f32 %v629, %v636
        %v639 = vmul.f32 %v637, 1.442695
        %v640 = vpow.pop %v639
        %v641 = vmul.f32 %v638, 1.442695
        %v642 = vpow.pop %v641
        %v643 = vsel %vm411, %v640, 0.0
        %644 = vadd.xlane.f32.xlu0 %v643
        %v645 = vpop.xlane.xlu0 %644
        %v646 = vsel %vm411, %v642, 0.0
        %647 = vadd.xlane.f32.xlu0 %v646
        %v648 = vpop.xlane.xlu0 %647
        %v649 = vrcp.pop %v645
        %v650 = vrcp.pop %v648
        %v651 = vmul.f32 %v640, %v649
        %v652 = vmul.f32 %v642, %v650
        %v653 = vpack.c.bf16 %v652, %v651
        %654 = vrot.lane.b32.xlu0 %v407, 80
        %v655 = vpop.permute.xlu0 %654
        %v658 = vsel %vm411, %v653, 0
        %660 = vmatpush.bf16.msra.mxu0 0
        %661 = vmatpush.bf16.msra.mxu0 0
        %662 = vmatpush.bf16.msra.mxu0 0
        %663 = vmatpush.bf16.msra.mxu0 0
        %664 = vmatpush.bf16.msra.mxu0 0
        %665 = vmatpush.bf16.msra.mxu0 0
        %666 = vmatpush.bf16.msra.mxu0 0
        %667 = vmatpush.bf16.msra.mxu0 %v655
        %668 = vmatmul.bf16.gmra.mxu0 %v658
        %v669 = vpop.f32.mrf.mxu0
        %v670 = vadd.f32 0.0, %v669
        %v671 = vpop.f32.mrf.mxu0
        %v672 = vadd.f32 0.0, %v671
        %673 = vdwg.mxu0
        %676 = vrot.lane.b32.xlu0 %v536, 16
        %v677 = vpop.permute.xlu0 %676
        %678 = vrot.lane.b32.xlu0 %v538, 16
        %v679 = vpop.permute.xlu0 %678
        %684 = vrot.lane.b32.xlu0 %v603, 32
        %v685 = vpop.permute.xlu0 %684
        %686 = vrot.lane.b32.xlu0 %v605, 32
        %v687 = vpop.permute.xlu0 %686
        %692 = vrot.lane.b32.xlu0 %v670, 48
        %v693 = vpop.permute.xlu0 %692
        %694 = vrot.lane.b32.xlu0 %v672, 48
        %v695 = vpop.permute.xlu0 %694
        %v698 = vsel %vm411, %v468, %v677
        %v699 = vsel %vm411, %v470, %v679
        %vm700 = vcmask 261120
        %v701 = vsel %vm700, %v698, %v685
        %v702 = vsel %vm700, %v699, %v687
        %vm703 = vcmask 392192
        %v704 = vsel %vm703, %v701, %v693
        %v705 = vsel %vm703, %v702, %v695
        %v706 = vpack.c.bf16 %v705, %v704
        %v707 = vld [vmem:[%s4 + $0x3] ss:$0 sm:$0xff]
        %v716 = vunpack.c.h.b16 %v312
        %v717 = vunpack.c.h.b16 %v314
        %v718 = vunpack.c.h.b16 %v316
        %v719 = vunpack.c.h.b16 %v318
        %v720 = vunpack.c.h.b16 %v320
        %v721 = vunpack.c.h.b16 %v322
        %v722 = vunpack.c.h.b16 %v324
        %v723 = vunpack.c.h.b16 %v326
        %v724 = vpack.c.b16 %v717, %v716
        %v725 = vpack.c.b16 %v719, %v718
        %v726 = vpack.c.b16 %v721, %v720
        %v727 = vpack.c.b16 %v723, %v722
        %v733 = vsel %vm253, %v706, 0
        %735 = vmatpush.bf16.msra.mxu0 0
        %736 = vmatpush.bf16.msra.mxu0 0
        %737 = vmatpush.bf16.msra.mxu0 0
        %738 = vmatpush.bf16.msra.mxu0 0
        %739 = vmatpush.bf16.msra.mxu0 %v727
        %740 = vmatpush.bf16.msra.mxu0 %v726
        %741 = vmatpush.bf16.msra.mxu0 %v725
        %742 = vmatpush.bf16.msra.mxu0 %v724
        %743 = vmatmul.bf16.gmra.mxu0 %v733
        %v744 = vpop.f32.mrf.mxu0
        %v745 = vadd.f32 %v707, %v744
        %v746 = vpop.f32.mrf.mxu0
        %v747 = vadd.f32 %v707, %v746
        %748 = vdwg.mxu0
        %v749 = vadd.f32 %v745, %v307
        %v750 = vadd.f32 %v747, %v308
        %v751 = vld [vmem:[%s4 + $0x6] ss:$0 sm:$0xff]
        %v752 = vld [vmem:[%s4 + $0x7] ss:$0 sm:$0xff]
        %v753 = vsel %vm253, %v749, 0.0
        %754 = vadd.xlane.f32.xlu0 %v753
        %v755 = vpop.xlane.xlu0 %754
        %v756 = vsel %vm253, %v750, 0.0
        %757 = vadd.xlane.f32.xlu0 %v756
        %v758 = vpop.xlane.xlu0 %757
        %v759 = vmul.f32 %v755, %v266
        %v760 = vmul.f32 %v758, %v266
        %v761 = vsub.f32 %v749, %v759
        %v762 = vsub.f32 %v750, %v760
        %v763 = vmul.f32 %v761, %v761
        %v764 = vmul.f32 %v762, %v762
        %v765 = vsel %vm253, %v763, 0.0
        %766 = vadd.xlane.f32.xlu0 %v765
        %v767 = vpop.xlane.xlu0 %766
        %v768 = vsel %vm253, %v764, 0.0
        %769 = vadd.xlane.f32.xlu0 %v768
        %v770 = vpop.xlane.xlu0 %769
        %v771 = vmul.f32 %v767, %v266
        %v772 = vmul.f32 %v770, %v266
        %v773 = vadd.f32 %v771, 1e-12
        %v774 = vadd.f32 %v772, 1e-12
        %v775 = vrsqrt.pop %v773
        %v776 = vmul.f32 %v775, %v773
        %v777 = vmul.f32 %v776, %v775
        %v778 = vmul.f32 0.5, %v777
        %v779 = vsub.f32 1.5, %v778
        %v780 = vmul.f32 %v775, %v779
        %vm781 = vweird.f32 %v773
        %vm782 = vweird.f32 %v775
        %vm783 = vmor %vm781, %vm782
        %v784 = vsel %vm783, %v775, %v780
        %v785 = vrsqrt.pop %v774
        %v786 = vmul.f32 %v785, %v774
        %v787 = vmul.f32 %v786, %v785
        %v788 = vmul.f32 0.5, %v787
        %v789 = vsub.f32 1.5, %v788
        %v790 = vmul.f32 %v785, %v789
        %vm791 = vweird.f32 %v774
        %vm792 = vweird.f32 %v785
        %vm793 = vmor %vm791, %vm792
        %v794 = vsel %vm793, %v785, %v790
        %v795 = vmul.f32 %v761, %v784
        %v796 = vmul.f32 %v762, %v794
        %v797 = vmul.f32 %v795, %v751
        %v798 = vmul.f32 %v796, %v751
        %v799 = vadd.f32 %v797, %v752
        %v800 = vadd.f32 %v798, %v752
        %v801 = vpack.c.bf16 %v800, %v799
        %v802 = vld [vmem:[%s4 + $0x4] ss:$0 sm:$0xff]
        %v803 = vunpack.c.l.b16 %v312
        %v804 = vunpack.c.l.b16 %v314
        %v805 = vunpack.c.l.b16 %v316
        %v806 = vunpack.c.l.b16 %v318
        %v807 = vunpack.c.l.b16 %v320
        %v808 = vunpack.c.l.b16 %v322
        %v809 = vunpack.c.l.b16 %v324
        %v810 = vunpack.c.l.b16 %v326
        %v811 = vpack.c.b16 %v804, %v803
        %v812 = vpack.c.b16 %v806, %v805
        %v813 = vpack.c.b16 %v808, %v807
        %v814 = vpack.c.b16 %v810, %v809
        %v820 = vsel %vm253, %v801, 0
        %822 = vmatpush.bf16.msra.mxu0 0
        %823 = vmatpush.bf16.msra.mxu0 0
        %824 = vmatpush.bf16.msra.mxu0 0
        %825 = vmatpush.bf16.msra.mxu0 0
        %826 = vmatpush.bf16.msra.mxu0 %v814
        %827 = vmatpush.bf16.msra.mxu0 %v813
        %828 = vmatpush.bf16.msra.mxu0 %v812
        %829 = vmatpush.bf16.msra.mxu0 %v811
        %830 = vmatmul.bf16.gmra.mxu0 %v820
        %v831 = vpop.f32.mrf.mxu0
        %v832 = vadd.f32 %v802, %v831
        %v833 = vpop.f32.mrf.mxu0
        %v834 = vadd.f32 %v802, %v833
        %835 = vdwg.mxu0
        %v836 = vmul.f32 %v832, %v832
        %v837 = vmul.f32 %v834, %v834
        %v838 = vmul.f32 %v832, %v836
        %v839 = vmul.f32 %v834, %v837
        %v840 = vmul.f32 %v838, 0.044715
        %v841 = vmul.f32 %v839, 0.044715
        %v842 = vadd.f32 %v832, %v840
        %v843 = vadd.f32 %v834, %v841
        %v844 = vmul.f32 %v842, 0.7978846
        %v845 = vmul.f32 %v843, 0.7978846
        %v846 = vtanh.pop %v844
        %v847 = vtanh.pop %v845
        %v848 = vadd.f32 %v846, 1.0
        %v849 = vadd.f32 %v847, 1.0
        %v850 = vmul.f32 %v848, 0.5
        %v851 = vmul.f32 %v849, 0.5
        %v852 = vmul.f32 %v832, %v850
        %v853 = vmul.f32 %v834, %v851
        %v854 = vpack.c.bf16 %v853, %v852
        %v855 = vld [vmem:[%s3] sm:$0xf]
        %v856 = vld [vmem:[%s3 + $0x4] sm:$0xf]
        %v857 = vld [vmem:[%s3 + $0x8] sm:$0xf]
        %v858 = vld [vmem:[%s3 + $0xc] sm:$0xf]
        %v859 = vld [vmem:[%s3 + $0x10] sm:$0xf]
        %v860 = vld [vmem:[%s3 + $0x14] sm:$0xf]
        %v861 = vld [vmem:[%s3 + $0x18] sm:$0xf]
        %v862 = vld [vmem:[%s3 + $0x1c] sm:$0xf]
        %v863 = vld [vmem:[%s3 + $0x20] sm:$0xf]
        %v864 = vld [vmem:[%s3 + $0x24] sm:$0xf]
        %v865 = vld [vmem:[%s3 + $0x28] sm:$0xf]
        %v866 = vld [vmem:[%s3 + $0x2c] sm:$0xf]
        %v867 = vld [vmem:[%s3 + $0x30] sm:$0xf]
        %v868 = vld [vmem:[%s3 + $0x34] sm:$0xf]
        %v869 = vld [vmem:[%s3 + $0x38] sm:$0xf]
        %v870 = vld [vmem:[%s3 + $0x3c] sm:$0xf]
        %v871 = vld [vmem:[%s4 + $0x5] ss:$0 sm:$0xff]
        %v888 = vunpack.c.l.b16 %v855
        %v889 = vunpack.c.l.b16 %v856
        %v890 = vunpack.c.l.b16 %v857
        %v891 = vunpack.c.l.b16 %v858
        %v892 = vunpack.c.l.b16 %v859
        %v893 = vunpack.c.l.b16 %v860
        %v894 = vunpack.c.l.b16 %v861
        %v895 = vunpack.c.l.b16 %v862
        %v896 = vunpack.c.l.b16 %v863
        %v897 = vunpack.c.l.b16 %v864
        %v898 = vunpack.c.l.b16 %v865
        %v899 = vunpack.c.l.b16 %v866
        %v900 = vunpack.c.l.b16 %v867
        %v901 = vunpack.c.l.b16 %v868
        %v902 = vunpack.c.l.b16 %v869
        %v903 = vunpack.c.l.b16 %v870
        %v904 = vpack.c.b16 %v889, %v888
        %v905 = vpack.c.b16 %v891, %v890
        %v906 = vpack.c.b16 %v893, %v892
        %v907 = vpack.c.b16 %v895, %v894
        %v908 = vpack.c.b16 %v897, %v896
        %v909 = vpack.c.b16 %v899, %v898
        %v910 = vpack.c.b16 %v901, %v900
        %v911 = vpack.c.b16 %v903, %v902
        %920 = vmatpush.bf16.msra.mxu0 %v911
        %921 = vmatpush.bf16.msra.mxu0 %v910
        %922 = vmatpush.bf16.msra.mxu0 %v909
        %923 = vmatpush.bf16.msra.mxu0 %v908
        %924 = vmatpush.bf16.msra.mxu0 %v907
        %925 = vmatpush.bf16.msra.mxu0 %v906
        %926 = vmatpush.bf16.msra.mxu0 %v905
        %927 = vmatpush.bf16.msra.mxu0 %v904
        %928 = vmatmul.bf16.gmra.mxu0 %v854
        %v929 = vpop.f32.mrf.mxu0
        %v930 = vadd.f32 %v871, %v929
        %v931 = vpop.f32.mrf.mxu0
        %v932 = vadd.f32 %v871, %v931
        %933 = vdwg.mxu0
        %v934 = vadd.f32 %v930, %v799
        %v935 = vadd.f32 %v932, %v800
        %v936 = vld [vmem:[%s4 + $0x10] ss:$0 sm:$0xff]
        %v937 = vld [vmem:[%s4 + $0x11] ss:$0 sm:$0xff]
        %v938 = vsel %vm253, %v934, 0.0
        %939 = vadd.xlane.f32.xlu0 %v938
        %v940 = vpop.xlane.xlu0 %939
        %v941 = vsel %vm253, %v935, 0.0
        %942 = vadd.xlane.f32.xlu0 %v941
        %v943 = vpop.xlane.xlu0 %942
        %v944 = vmul.f32 %v940, %v266
        %v945 = vmul.f32 %v943, %v266
        %v946 = vsub.f32 %v934, %v944
        %v947 = vsub.f32 %v935, %v945
        %v948 = vmul.f32 %v946, %v946
        %v949 = vmul.f32 %v947, %v947
        %v950 = vsel %vm253, %v948, 0.0
        %951 = vadd.xlane.f32.xlu0 %v950
        %v952 = vpop.xlane.xlu0 %951
        %v953 = vsel %vm253, %v949, 0.0
        %954 = vadd.xlane.f32.xlu0 %v953
        %v955 = vpop.xlane.xlu0 %954
        %v956 = vmul.f32 %v952, %v266
        %v957 = vmul.f32 %v955, %v266
        %v958 = vadd.f32 %v956, 1e-12
        %v959 = vadd.f32 %v957, 1e-12
        %v960 = vrsqrt.pop %v958
        %v961 = vmul.f32 %v960, %v958
        %v962 = vmul.f32 %v961, %v960
        %v963 = vmul.f32 0.5, %v962
        %v964 = vsub.f32 1.5, %v963
        %v965 = vmul.f32 %v960, %v964
        %vm966 = vweird.f32 %v958
        %vm967 = vweird.f32 %v960
        %vm968 = vmor %vm966, %vm967
        %v969 = vsel %vm968, %v960, %v965
        %v970 = vrsqrt.pop %v959
        %v971 = vmul.f32 %v970, %v959
        %v972 = vmul.f32 %v971, %v970
        %v973 = vmul.f32 0.5, %v972
        %v974 = vsub.f32 1.5, %v973
        %v975 = vmul.f32 %v970, %v974
        %vm976 = vweird.f32 %v959
        %vm977 = vweird.f32 %v970
        %vm978 = vmor %vm976, %vm977
        %v979 = vsel %vm978, %v970, %v975
        %v980 = vmul.f32 %v946, %v969
        %v981 = vmul.f32 %v947, %v979
        %v982 = vmul.f32 %v980, %v936
        %v983 = vmul.f32 %v981, %v936
        %v984 = vadd.f32 %v982, %v937
        %v985 = vadd.f32 %v983, %v937
        %s986 = scalar_lea.vmem %s2, 128
        %v987 = vld [vmem:[%s986] sm:$0xff]
        %v988 = vld [vmem:[%s986 + $0x8] sm:$0xff]
        %v989 = vld [vmem:[%s986 + $0x10] sm:$0xff]
        %v990 = vld [vmem:[%s986 + $0x18] sm:$0xff]
        %v991 = vld [vmem:[%s986 + $0x20] sm:$0xff]
        %v992 = vld [vmem:[%s986 + $0x28] sm:$0xff]
        %v993 = vld [vmem:[%s986 + $0x30] sm:$0xff]
        %v994 = vld [vmem:[%s986 + $0x38] sm:$0xff]
        %v995 = vld [vmem:[%s986 + $0x40] sm:$0xff]
        %v996 = vld [vmem:[%s986 + $0x48] sm:$0xff]
        %v997 = vld [vmem:[%s986 + $0x50] sm:$0xff]
        %v998 = vld [vmem:[%s986 + $0x58] sm:$0xff]
        %v999 = vld [vmem:[%s986 + $0x60] sm:$0xff]
        %v1000 = vld [vmem:[%s986 + $0x68] sm:$0xff]
        %v1001 = vld [vmem:[%s986 + $0x70] sm:$0xff]
        %v1002 = vld [vmem:[%s986 + $0x78] sm:$0xff]
        %v1003 = vpack.c.bf16 %v985, %v984
        %s1004 = scalar_lea.vmem %s4, 18
        %v1005 = vld [vmem:[%s1004] ss:$8 sm:$0x3]
        %v1007 = vperm.slane %v1005, 0
        %v1008 = vperm.slane %v1005, 1
        %v1019 = vunpack.c.l.b16 %v987
        %v1020 = vunpack.c.h.b16 %v987
        %v1021 = vunpack.c.l.b16 %v989
        %v1022 = vunpack.c.h.b16 %v989
        %v1023 = vunpack.c.l.b16 %v991
        %v1024 = vunpack.c.h.b16 %v991
        %v1025 = vunpack.c.l.b16 %v993
        %v1026 = vunpack.c.h.b16 %v993
        %v1027 = vunpack.c.l.b16 %v995
        %v1028 = vunpack.c.h.b16 %v995
        %v1029 = vunpack.c.l.b16 %v997
        %v1030 = vunpack.c.h.b16 %v997
        %v1031 = vunpack.c.l.b16 %v999
        %v1032 = vunpack.c.h.b16 %v999
        %v1033 = vunpack.c.l.b16 %v1001
        %v1034 = vunpack.c.h.b16 %v1001
        %v1035 = vpack.c.b16 %v1021, %v1019
        %v1036 = vpack.c.b16 %v1022, %v1020
        %v1037 = vpack.c.b16 %v1025, %v1023
        %v1038 = vpack.c.b16 %v1026, %v1024
        %v1039 = vpack.c.b16 %v1029, %v1027
        %v1040 = vpack.c.b16 %v1030, %v1028
        %v1041 = vpack.c.b16 %v1033, %v1031
        %v1042 = vpack.c.b16 %v1034, %v1032
        %v1052 = vsel %vm253, %v1003, 0
        %1054 = vmatpush.bf16.msra.mxu0 0
        %1055 = vmatpush.bf16.msra.mxu0 0
        %1056 = vmatpush.bf16.msra.mxu0 0
        %1057 = vmatpush.bf16.msra.mxu0 0
        %1058 = vmatpush.bf16.msra.mxu0 %v1041
        %1059 = vmatpush.bf16.msra.mxu0 %v1039
        %1060 = vmatpush.bf16.msra.mxu0 %v1037
        %1061 = vmatpush.bf16.msra.mxu0 %v1035
        %1062 = vmatmul.bf16.gmra.mxu0 %v1052
        %v1063 = vpop.f32.mrf.mxu0
        %v1064 = vadd.f32 %v1007, %v1063
        %v1065 = vpop.f32.mrf.mxu0
        %v1066 = vadd.f32 %v1007, %v1065
        %1067 = vdwg.mxu0
        %1068 = vmatpush.bf16.msra.mxu0 0
        %1069 = vmatpush.bf16.msra.mxu0 0
        %1070 = vmatpush.bf16.msra.mxu0 0
        %1071 = vmatpush.bf16.msra.mxu0 0
        %1072 = vmatpush.bf16.msra.mxu0 %v1042
        %1073 = vmatpush.bf16.msra.mxu0 %v1040
        %1074 = vmatpush.bf16.msra.mxu0 %v1038
        %1075 = vmatpush.bf16.msra.mxu0 %v1036
        %1076 = vmatmul.bf16.gmra.mxu0 %v1052
        %v1077 = vpop.f32.mrf.mxu0
        %v1078 = vadd.f32 %v1008, %v1077
        %v1079 = vpop.f32.mrf.mxu0
        %v1080 = vadd.f32 %v1008, %v1079
        %1081 = vdwg.mxu0
        %v1082 = vpack.c.bf16 %v1066, %v1064
        %v1083 = vpack.c.bf16 %v1080, %v1078
        %1085 = vrot.lane.b32.xlu0 %v1082, 64
        %v1086 = vpop.permute.xlu0 %1085
        %v1088 = vsel %vm411, %v1082, 0
        %v1091 = vsel %vm411, %v1086, 0
        %1093 = vmatpush.bf16.xpose.msra.mxu0 0
        %1094 = vmatpush.bf16.xpose.msra.mxu0 0
        %1095 = vmatpush.bf16.xpose.msra.mxu0 0
        %1096 = vmatpush.bf16.xpose.msra.mxu0 0
        %1097 = vmatpush.bf16.xpose.msra.mxu0 0
        %1098 = vmatpush.bf16.xpose.msra.mxu0 0
        %1099 = vmatpush.bf16.xpose.msra.mxu0 0
        %1100 = vmatpush.bf16.xpose.msra.mxu0 %v1091
        %1101 = vmatmul.bf16.gmra.mxu0 %v1088
        %v1102 = vpop.f32.mrf.mxu0
        %v1103 = vadd.f32 %v309, %v1102
        %v1104 = vpop.f32.mrf.mxu0
        %v1105 = vadd.f32 %v310, %v1104
        %1106 = vdwg.mxu0
        %v1107 = vsel %vm411, %v1103, -inf
        %1108 = vmax.xlane.f32.xlu0 %v1107
        %v1109 = vpop.xlane.xlu0 %1108
        %v1110 = vsel %vm411, %v1105, -inf
        %1111 = vmax.xlane.f32.xlu0 %v1110
        %v1112 = vpop.xlane.xlu0 %1111
        %v1113 = vsub.f32 %v1103, %v1109
        %v1114 = vsub.f32 %v1105, %v1112
        %v1115 = vmul.f32 %v1113, 1.442695
        %v1116 = vpow.pop %v1115
        %v1117 = vmul.f32 %v1114, 1.442695
        %v1118 = vpow.pop %v1117
        %v1119 = vsel %vm411, %v1116, 0.0
        %1120 = vadd.xlane.f32.xlu0 %v1119
        %v1121 = vpop.xlane.xlu0 %1120
        %v1122 = vsel %vm411, %v1118, 0.0
        %1123 = vadd.xlane.f32.xlu0 %v1122
        %v1124 = vpop.xlane.xlu0 %1123
        %v1125 = vrcp.pop %v1121
        %v1126 = vrcp.pop %v1124
        %v1127 = vmul.f32 %v1116, %v1125
        %v1128 = vmul.f32 %v1118, %v1126
        %v1129 = vpack.c.bf16 %v1128, %v1127
        %v1131 = vsel %vm411, %v1129, 0
        %1133 = vmatpush.bf16.msra.mxu0 0
        %1134 = vmatpush.bf16.msra.mxu0 0
        %1135 = vmatpush.bf16.msra.mxu0 0
        %1136 = vmatpush.bf16.msra.mxu0 0
        %1137 = vmatpush.bf16.msra.mxu0 0
        %1138 = vmatpush.bf16.msra.mxu0 0
        %1139 = vmatpush.bf16.msra.mxu0 0
        %1140 = vmatpush.bf16.msra.mxu0 %v1083
        %1141 = vmatmul.bf16.gmra.mxu0 %v1131
        %v1142 = vpop.f32.mrf.mxu0
        %v1143 = vadd.f32 0.0, %v1142
        %v1144 = vpop.f32.mrf.mxu0
        %v1145 = vadd.f32 0.0, %v1144
        %1146 = vdwg.mxu0
        %1147 = vrot.lane.b32.xlu0 %v1082, 112
        %v1148 = vpop.permute.xlu0 %1147
        %1149 = vrot.lane.b32.xlu0 %v1082, 48
        %v1150 = vpop.permute.xlu0 %1149
        %v1152 = vsel %vm411, %v1148, 0
        %v1155 = vsel %vm411, %v1150, 0
        %1157 = vmatpush.bf16.xpose.msra.mxu0 0
        %1158 = vmatpush.bf16.xpose.msra.mxu0 0
        %1159 = vmatpush.bf16.xpose.msra.mxu0 0
        %1160 = vmatpush.bf16.xpose.msra.mxu0 0
        %1161 = vmatpush.bf16.xpose.msra.mxu0 0
        %1162 = vmatpush.bf16.xpose.msra.mxu0 0
        %1163 = vmatpush.bf16.xpose.msra.mxu0 0
        %1164 = vmatpush.bf16.xpose.msra.mxu0 %v1155
        %1165 = vmatmul.bf16.gmra.mxu0 %v1152
        %v1166 = vpop.f32.mrf.mxu0
        %v1167 = vadd.f32 %v309, %v1166
        %v1168 = vpop.f32.mrf.mxu0
        %v1169 = vadd.f32 %v310, %v1168
        %1170 = vdwg.mxu0
        %v1171 = vsel %vm411, %v1167, -inf
        %1172 = vmax.xlane.f32.xlu0 %v1171
        %v1173 = vpop.xlane.xlu0 %1172
        %v1174 = vsel %vm411, %v1169, -inf
        %1175 = vmax.xlane.f32.xlu0 %v1174
        %v1176 = vpop.xlane.xlu0 %1175
        %v1177 = vsub.f32 %v1167, %v1173
        %v1178 = vsub.f32 %v1169, %v1176
        %v1179 = vmul.f32 %v1177, 1.442695
        %v1180 = vpow.pop %v1179
        %v1181 = vmul.f32 %v1178, 1.442695
        %v1182 = vpow.pop %v1181
        %v1183 = vsel %vm411, %v1180, 0.0
        %1184 = vadd.xlane.f32.xlu0 %v1183
        %v1185 = vpop.xlane.xlu0 %1184
        %v1186 = vsel %vm411, %v1182, 0.0
        %1187 = vadd.xlane.f32.xlu0 %v1186
        %v1188 = vpop.xlane.xlu0 %1187
        %v1189 = vrcp.pop %v1185
        %v1190 = vrcp.pop %v1188
        %v1191 = vmul.f32 %v1180, %v1189
        %v1192 = vmul.f32 %v1182, %v1190
        %v1193 = vpack.c.bf16 %v1192, %v1191
        %1195 = vrot.lane.b32.xlu0 %v1083, 112
        %v1196 = vpop.permute.xlu0 %1195
        %v1199 = vsel %vm411, %v1193, 0
        %1201 = vmatpush.bf16.msra.mxu0 0
        %1202 = vmatpush.bf16.msra.mxu0 0
        %1203 = vmatpush.bf16.msra.mxu0 0
        %1204 = vmatpush.bf16.msra.mxu0 0
        %1205 = vmatpush.bf16.msra.mxu0 0
        %1206 = vmatpush.bf16.msra.mxu0 0
        %1207 = vmatpush.bf16.msra.mxu0 0
        %1208 = vmatpush.bf16.msra.mxu0 %v1196
        %1209 = vmatmul.bf16.gmra.mxu0 %v1199
        %v1210 = vpop.f32.mrf.mxu0
        %v1211 = vadd.f32 0.0, %v1210
        %v1212 = vpop.f32.mrf.mxu0
        %v1213 = vadd.f32 0.0, %v1212
        %1214 = vdwg.mxu0
        %1215 = vrot.lane.b32.xlu0 %v1082, 96
        %v1216 = vpop.permute.xlu0 %1215
        %1217 = vrot.lane.b32.xlu0 %v1082, 32
        %v1218 = vpop.permute.xlu0 %1217
        %v1220 = vsel %vm411, %v1216, 0
        %v1223 = vsel %vm411, %v1218, 0
        %1225 = vmatpush.bf16.xpose.msra.mxu0 0
        %1226 = vmatpush.bf16.xpose.msra.mxu0 0
        %1227 = vmatpush.bf16.xpose.msra.mxu0 0
        %1228 = vmatpush.bf16.xpose.msra.mxu0 0
        %1229 = vmatpush.bf16.xpose.msra.mxu0 0
        %1230 = vmatpush.bf16.xpose.msra.mxu0 0
        %1231 = vmatpush.bf16.xpose.msra.mxu0 0
        %1232 = vmatpush.bf16.xpose.msra.mxu0 %v1223
        %1233 = vmatmul.bf16.gmra.mxu0 %v1220
        %v1234 = vpop.f32.mrf.mxu0
        %v1235 = vadd.f32 %v309, %v1234
        %v1236 = vpop.f32.mrf.mxu0
        %v1237 = vadd.f32 %v310, %v1236
        %1238 = vdwg.mxu0
        %v1239 = vsel %vm411, %v1235, -inf
        %1240 = vmax.xlane.f32.xlu0 %v1239
        %v1241 = vpop.xlane.xlu0 %1240
        %v1242 = vsel %vm411, %v1237, -inf
        %1243 = vmax.xlane.f32.xlu0 %v1242
        %v1244 = vpop.xlane.xlu0 %1243
        %v1245 = vsub.f32 %v1235, %v1241
        %v1246 = vsub.f32 %v1237, %v1244
        %v1247 = vmul.f32 %v1245, 1.442695
        %v1248 = vpow.pop %v1247
        %v1249 = vmul.f32 %v1246, 1.442695
        %v1250 = vpow.pop %v1249
        %v1251 = vsel %vm411, %v1248, 0.0
        %1252 = vadd.xlane.f32.xlu0 %v1251
        %v1253 = vpop.xlane.xlu0 %1252
        %v1254 = vsel %vm411, %v1250, 0.0
        %1255 = vadd.xlane.f32.xlu0 %v1254
        %v1256 = vpop.xlane.xlu0 %1255
        %v1257 = vrcp.pop %v1253
        %v1258 = vrcp.pop %v1256
        %v1259 = vmul.f32 %v1248, %v1257
        %v1260 = vmul.f32 %v1250, %v1258
        %v1261 = vpack.c.bf16 %v1260, %v1259
        %1262 = vrot.lane.b32.xlu0 %v1083, 96
        %v1263 = vpop.permute.xlu0 %1262
        %v1266 = vsel %vm411, %v1261, 0
        %1268 = vmatpush.bf16.msra.mxu0 0
        %1269 = vmatpush.bf16.msra.mxu0 0
        %1270 = vmatpush.bf16.msra.mxu0 0
        %1271 = vmatpush.bf16.msra.mxu0 0
        %1272 = vmatpush.bf16.msra.mxu0 0
        %1273 = vmatpush.bf16.msra.mxu0 0
        %1274 = vmatpush.bf16.msra.mxu0 0
        %1275 = vmatpush.bf16.msra.mxu0 %v1263
        %1276 = vmatmul.bf16.gmra.mxu0 %v1266
        %v1277 = vpop.f32.mrf.mxu0
        %v1278 = vadd.f32 0.0, %v1277
        %v1279 = vpop.f32.mrf.mxu0
        %v1280 = vadd.f32 0.0, %v1279
        %1281 = vdwg.mxu0
        %1282 = vrot.lane.b32.xlu0 %v1082, 80
        %v1283 = vpop.permute.xlu0 %1282
        %1284 = vrot.lane.b32.xlu0 %v1082, 16
        %v1285 = vpop.permute.xlu0 %1284
        %v1287 = vsel %vm411, %v1283, 0
        %v1290 = vsel %vm411, %v1285, 0
        %1292 = vmatpush.bf16.xpose.msra.mxu0 0
        %1293 = vmatpush.bf16.xpose.msra.mxu0 0
        %1294 = vmatpush.bf16.xpose.msra.mxu0 0
        %1295 = vmatpush.bf16.xpose.msra.mxu0 0
        %1296 = vmatpush.bf16.xpose.msra.mxu0 0
        %1297 = vmatpush.bf16.xpose.msra.mxu0 0
        %1298 = vmatpush.bf16.xpose.msra.mxu0 0
        %1299 = vmatpush.bf16.xpose.msra.mxu0 %v1290
        %1300 = vmatmul.bf16.gmra.mxu0 %v1287
        %v1301 = vpop.f32.mrf.mxu0
        %v1302 = vadd.f32 %v309, %v1301
        %v1303 = vpop.f32.mrf.mxu0
        %v1304 = vadd.f32 %v310, %v1303
        %1305 = vdwg.mxu0
        %v1306 = vsel %vm411, %v1302, -inf
        %1307 = vmax.xlane.f32.xlu0 %v1306
        %v1308 = vpop.xlane.xlu0 %1307
        %v1309 = vsel %vm411, %v1304, -inf
        %1310 = vmax.xlane.f32.xlu0 %v1309
        %v1311 = vpop.xlane.xlu0 %1310
        %v1312 = vsub.f32 %v1302, %v1308
        %v1313 = vsub.f32 %v1304, %v1311
        %v1314 = vmul.f32 %v1312, 1.442695
        %v1315 = vpow.pop %v1314
        %v1316 = vmul.f32 %v1313, 1.442695
        %v1317 = vpow.pop %v1316
        %v1318 = vsel %vm411, %v1315, 0.0
        %1319 = vadd.xlane.f32.xlu0 %v1318
        %v1320 = vpop.xlane.xlu0 %1319
        %v1321 = vsel %vm411, %v1317, 0.0
        %1322 = vadd.xlane.f32.xlu0 %v1321
        %v1323 = vpop.xlane.xlu0 %1322
        %v1324 = vrcp.pop %v1320
        %v1325 = vrcp.pop %v1323
        %v1326 = vmul.f32 %v1315, %v1324
        %v1327 = vmul.f32 %v1317, %v1325
        %v1328 = vpack.c.bf16 %v1327, %v1326
        %1329 = vrot.lane.b32.xlu0 %v1083, 80
        %v1330 = vpop.permute.xlu0 %1329
        %v1333 = vsel %vm411, %v1328, 0
        %1335 = vmatpush.bf16.msra.mxu0 0
        %1336 = vmatpush.bf16.msra.mxu0 0
        %1337 = vmatpush.bf16.msra.mxu0 0
        %1338 = vmatpush.bf16.msra.mxu0 0
        %1339 = vmatpush.bf16.msra.mxu0 0
        %1340 = vmatpush.bf16.msra.mxu0 0
        %1341 = vmatpush.bf16.msra.mxu0 0
        %1342 = vmatpush.bf16.msra.mxu0 %v1330
        %1343 = vmatmul.bf16.gmra.mxu0 %v1333
        %v1344 = vpop.f32.mrf.mxu0
        %v1345 = vadd.f32 0.0, %v1344
        %v1346 = vpop.f32.mrf.mxu0
        %v1347 = vadd.f32 0.0, %v1346
        %1348 = vdwg.mxu0
        %1351 = vrot.lane.b32.xlu0 %v1211, 16
        %v1352 = vpop.permute.xlu0 %1351
        %1353 = vrot.lane.b32.xlu0 %v1213, 16
        %v1354 = vpop.permute.xlu0 %1353
        %1359 = vrot.lane.b32.xlu0 %v1278, 32
        %v1360 = vpop.permute.xlu0 %1359
        %1361 = vrot.lane.b32.xlu0 %v1280, 32
        %v1362 = vpop.permute.xlu0 %1361
        %1367 = vrot.lane.b32.xlu0 %v1345, 48
        %v1368 = vpop.permute.xlu0 %1367
        %1369 = vrot.lane.b32.xlu0 %v1347, 48
        %v1370 = vpop.permute.xlu0 %1369
        %v1373 = vsel %vm411, %v1143, %v1352
        %v1374 = vsel %vm411, %v1145, %v1354
        %v1375 = vsel %vm700, %v1373, %v1360
        %v1376 = vsel %vm700, %v1374, %v1362
        %v1377 = vsel %vm703, %v1375, %v1368
        %v1378 = vsel %vm703, %v1376, %v1370
        %v1379 = vpack.c.bf16 %v1378, %v1377
        %v1380 = vld [vmem:[%s4 + $0x13] ss:$0 sm:$0xff]
        %v1389 = vunpack.c.h.b16 %v988
        %v1390 = vunpack.c.h.b16 %v990
        %v1391 = vunpack.c.h.b16 %v992
        %v1392 = vunpack.c.h.b16 %v994
        %v1393 = vunpack.c.h.b16 %v996
        %v1394 = vunpack.c.h.b16 %v998
        %v1395 = vunpack.c.h.b16 %v1000
        %v1396 = vunpack.c.h.b16 %v1002
        %v1397 = vpack.c.b16 %v1390, %v1389
        %v1398 = vpack.c.b16 %v1392, %v1391
        %v1399 = vpack.c.b16 %v1394, %v1393
        %v1400 = vpack.c.b16 %v1396, %v1395
        %v1406 = vsel %vm253, %v1379, 0
        %1408 = vmatpush.bf16.msra.mxu0 0
        %1409 = vmatpush.bf16.msra.mxu0 0
        %1410 = vmatpush.bf16.msra.mxu0 0
        %1411 = vmatpush.bf16.msra.mxu0 0
        %1412 = vmatpush.bf16.msra.mxu0 %v1400
        %1413 = vmatpush.bf16.msra.mxu0 %v1399
        %1414 = vmatpush.bf16.msra.mxu0 %v1398
        %1415 = vmatpush.bf16.msra.mxu0 %v1397
        %1416 = vmatmul.bf16.gmra.mxu0 %v1406
        %v1417 = vpop.f32.mrf.mxu0
        %v1418 = vadd.f32 %v1380, %v1417
        %v1419 = vpop.f32.mrf.mxu0
        %v1420 = vadd.f32 %v1380, %v1419
        %1421 = vdwg.mxu0
        %v1422 = vadd.f32 %v1418, %v984
        %v1423 = vadd.f32 %v1420, %v985
        %v1424 = vld [vmem:[%s4 + $0x16] ss:$0 sm:$0xff]
        %v1425 = vld [vmem:[%s4 + $0x17] ss:$0 sm:$0xff]
        %v1426 = vsel %vm253, %v1422, 0.0
        %1427 = vadd.xlane.f32.xlu0 %v1426
        %v1428 = vpop.xlane.xlu0 %1427
        %v1429 = vsel %vm253, %v1423, 0.0
        %1430 = vadd.xlane.f32.xlu0 %v1429
        %v1431 = vpop.xlane.xlu0 %1430
        %v1432 = vmul.f32 %v1428, %v266
        %v1433 = vmul.f32 %v1431, %v266
        %v1434 = vsub.f32 %v1422, %v1432
        %v1435 = vsub.f32 %v1423, %v1433
        %v1436 = vmul.f32 %v1434, %v1434
        %v1437 = vmul.f32 %v1435, %v1435
        %v1438 = vsel %vm253, %v1436, 0.0
        %1439 = vadd.xlane.f32.xlu0 %v1438
        %v1440 = vpop.xlane.xlu0 %1439
        %v1441 = vsel %vm253, %v1437, 0.0
        %1442 = vadd.xlane.f32.xlu0 %v1441
        %v1443 = vpop.xlane.xlu0 %1442
        %v1444 = vmul.f32 %v1440, %v266
        %v1445 = vmul.f32 %v1443, %v266
        %v1446 = vadd.f32 %v1444, 1e-12
        %v1447 = vadd.f32 %v1445, 1e-12
        %v1448 = vrsqrt.pop %v1446
        %v1449 = vmul.f32 %v1448, %v1446
        %v1450 = vmul.f32 %v1449, %v1448
        %v1451 = vmul.f32 0.5, %v1450
        %v1452 = vsub.f32 1.5, %v1451
        %v1453 = vmul.f32 %v1448, %v1452
        %vm1454 = vweird.f32 %v1446
        %vm1455 = vweird.f32 %v1448
        %vm1456 = vmor %vm1454, %vm1455
        %v1457 = vsel %vm1456, %v1448, %v1453
        %v1458 = vrsqrt.pop %v1447
        %v1459 = vmul.f32 %v1458, %v1447
        %v1460 = vmul.f32 %v1459, %v1458
        %v1461 = vmul.f32 0.5, %v1460
        %v1462 = vsub.f32 1.5, %v1461
        %v1463 = vmul.f32 %v1458, %v1462
        %vm1464 = vweird.f32 %v1447
        %vm1465 = vweird.f32 %v1458
        %vm1466 = vmor %vm1464, %vm1465
        %v1467 = vsel %vm1466, %v1458, %v1463
        %v1468 = vmul.f32 %v1434, %v1457
        %v1469 = vmul.f32 %v1435, %v1467
        %v1470 = vmul.f32 %v1468, %v1424
        %v1471 = vmul.f32 %v1469, %v1424
        %v1472 = vadd.f32 %v1470, %v1425
        %v1473 = vadd.f32 %v1471, %v1425
        %v1474 = vpack.c.bf16 %v1473, %v1472
        %v1475 = vld [vmem:[%s4 + $0x14] ss:$0 sm:$0xff]
        %v1476 = vunpack.c.l.b16 %v988
        %v1477 = vunpack.c.l.b16 %v990
        %v1478 = vunpack.c.l.b16 %v992
        %v1479 = vunpack.c.l.b16 %v994
        %v1480 = vunpack.c.l.b16 %v996
        %v1481 = vunpack.c.l.b16 %v998
        %v1482 = vunpack.c.l.b16 %v1000
        %v1483 = vunpack.c.l.b16 %v1002
        %v1484 = vpack.c.b16 %v1477, %v1476
        %v1485 = vpack.c.b16 %v1479, %v1478
        %v1486 = vpack.c.b16 %v1481, %v1480
        %v1487 = vpack.c.b16 %v1483, %v1482
        %v1493 = vsel %vm253, %v1474, 0
        %1495 = vmatpush.bf16.msra.mxu0 0
        %1496 = vmatpush.bf16.msra.mxu0 0
        %1497 = vmatpush.bf16.msra.mxu0 0
        %1498 = vmatpush.bf16.msra.mxu0 0
        %1499 = vmatpush.bf16.msra.mxu0 %v1487
        %1500 = vmatpush.bf16.msra.mxu0 %v1486
        %1501 = vmatpush.bf16.msra.mxu0 %v1485
        %1502 = vmatpush.bf16.msra.mxu0 %v1484
        %1503 = vmatmul.bf16.gmra.mxu0 %v1493
        %v1504 = vpop.f32.mrf.mxu0
        %v1505 = vadd.f32 %v1475, %v1504
        %v1506 = vpop.f32.mrf.mxu0
        %v1507 = vadd.f32 %v1475, %v1506
        %1508 = vdwg.mxu0
        %v1509 = vmul.f32 %v1505, %v1505
        %v1510 = vmul.f32 %v1507, %v1507
        %v1511 = vmul.f32 %v1505, %v1509
        %v1512 = vmul.f32 %v1507, %v1510
        %v1513 = vmul.f32 %v1511, 0.044715
        %v1514 = vmul.f32 %v1512, 0.044715
        %v1515 = vadd.f32 %v1505, %v1513
        %v1516 = vadd.f32 %v1507, %v1514
        %v1517 = vmul.f32 %v1515, 0.7978846
        %v1518 = vmul.f32 %v1516, 0.7978846
        %v1519 = vtanh.pop %v1517
        %v1520 = vtanh.pop %v1518
        %v1521 = vadd.f32 %v1519, 1.0
        %v1522 = vadd.f32 %v1520, 1.0
        %v1523 = vmul.f32 %v1521, 0.5
        %v1524 = vmul.f32 %v1522, 0.5
        %v1525 = vmul.f32 %v1505, %v1523
        %v1526 = vmul.f32 %v1507, %v1524
        %v1527 = vpack.c.bf16 %v1526, %v1525
        %s1528 = scalar_lea.vmem %s3, 64
        %v1529 = vld [vmem:[%s1528] sm:$0xf]
        %v1530 = vld [vmem:[%s1528 + $0x4] sm:$0xf]
        %v1531 = vld [vmem:[%s1528 + $0x8] sm:$0xf]
        %v1532 = vld [vmem:[%s1528 + $0xc] sm:$0xf]
        %v1533 = vld [vmem:[%s1528 + $0x10] sm:$0xf]
        %v1534 = vld [vmem:[%s1528 + $0x14] sm:$0xf]
        %v1535 = vld [vmem:[%s1528 + $0x18] sm:$0xf]
        %v1536 = vld [vmem:[%s1528 + $0x1c] sm:$0xf]
        %v1537 = vld [vmem:[%s1528 + $0x20] sm:$0xf]
        %v1538 = vld [vmem:[%s1528 + $0x24] sm:$0xf]
        %v1539 = vld [vmem:[%s1528 + $0x28] sm:$0xf]
        %v1540 = vld [vmem:[%s1528 + $0x2c] sm:$0xf]
        %v1541 = vld [vmem:[%s1528 + $0x30] sm:$0xf]
        %v1542 = vld [vmem:[%s1528 + $0x34] sm:$0xf]
        %v1543 = vld [vmem:[%s1528 + $0x38] sm:$0xf]
        %v1544 = vld [vmem:[%s1528 + $0x3c] sm:$0xf]
        %v1545 = vld [vmem:[%s4 + $0x15] ss:$0 sm:$0xff]
        %v1562 = vunpack.c.l.b16 %v1529
        %v1563 = vunpack.c.l.b16 %v1530
        %v1564 = vunpack.c.l.b16 %v1531
        %v1565 = vunpack.c.l.b16 %v1532
        %v1566 = vunpack.c.l.b16 %v1533
        %v1567 = vunpack.c.l.b16 %v1534
        %v1568 = vunpack.c.l.b16 %v1535
        %v1569 = vunpack.c.l.b16 %v1536
        %v1570 = vunpack.c.l.b16 %v1537
        %v1571 = vunpack.c.l.b16 %v1538
        %v1572 = vunpack.c.l.b16 %v1539
        %v1573 = vunpack.c.l.b16 %v1540
        %v1574 = vunpack.c.l.b16 %v1541
        %v1575 = vunpack.c.l.b16 %v1542
        %v1576 = vunpack.c.l.b16 %v1543
        %v1577 = vunpack.c.l.b16 %v1544
        %v1578 = vpack.c.b16 %v1563, %v1562
        %v1579 = vpack.c.b16 %v1565, %v1564
        %v1580 = vpack.c.b16 %v1567, %v1566
        %v1581 = vpack.c.b16 %v1569, %v1568
        %v1582 = vpack.c.b16 %v1571, %v1570
        %v1583 = vpack.c.b16 %v1573, %v1572
        %v1584 = vpack.c.b16 %v1575, %v1574
        %v1585 = vpack.c.b16 %v1577, %v1576
        %1594 = vmatpush.bf16.msra.mxu0 %v1585
        %1595 = vmatpush.bf16.msra.mxu0 %v1584
        %1596 = vmatpush.bf16.msra.mxu0 %v1583
        %1597 = vmatpush.bf16.msra.mxu0 %v1582
        %1598 = vmatpush.bf16.msra.mxu0 %v1581
        %1599 = vmatpush.bf16.msra.mxu0 %v1580
        %1600 = vmatpush.bf16.msra.mxu0 %v1579
        %1601 = vmatpush.bf16.msra.mxu0 %v1578
        %1602 = vmatmul.bf16.gmra.mxu0 %v1527
        %v1603 = vpop.f32.mrf.mxu0
        %v1604 = vadd.f32 %v1545, %v1603
        %v1605 = vpop.f32.mrf.mxu0
        %v1606 = vadd.f32 %v1545, %v1605
        %1607 = vdwg.mxu0
        %v1608 = vadd.f32 %v1604, %v1472
        %v1609 = vadd.f32 %v1606, %v1473
        %v1610 = vld [vmem:[%s4 + $0x20] ss:$0 sm:$0xff]
        %v1611 = vld [vmem:[%s4 + $0x21] ss:$0 sm:$0xff]
        %v1612 = vsel %vm253, %v1608, 0.0
        %1613 = vadd.xlane.f32.xlu0 %v1612
        %v1614 = vpop.xlane.xlu0 %1613
        %v1615 = vsel %vm253, %v1609, 0.0
        %1616 = vadd.xlane.f32.xlu0 %v1615
        %v1617 = vpop.xlane.xlu0 %1616
        %v1618 = vmul.f32 %v1614, %v266
        %v1619 = vmul.f32 %v1617, %v266
        %v1620 = vsub.f32 %v1608, %v1618
        %v1621 = vsub.f32 %v1609, %v1619
        %v1622 = vmul.f32 %v1620, %v1620
        %v1623 = vmul.f32 %v1621, %v1621
        %v1624 = vsel %vm253, %v1622, 0.0
        %1625 = vadd.xlane.f32.xlu0 %v1624
        %v1626 = vpop.xlane.xlu0 %1625
        %v1627 = vsel %vm253, %v1623, 0.0
        %1628 = vadd.xlane.f32.xlu0 %v1627
        %v1629 = vpop.xlane.xlu0 %1628
        %v1630 = vmul.f32 %v1626, %v266
        %v1631 = vmul.f32 %v1629, %v266
        %v1632 = vadd.f32 %v1630, 1e-12
        %v1633 = vadd.f32 %v1631, 1e-12
        %v1634 = vrsqrt.pop %v1632
        %v1635 = vmul.f32 %v1634, %v1632
        %v1636 = vmul.f32 %v1635, %v1634
        %v1637 = vmul.f32 0.5, %v1636
        %v1638 = vsub.f32 1.5, %v1637
        %v1639 = vmul.f32 %v1634, %v1638
        %vm1640 = vweird.f32 %v1632
        %vm1641 = vweird.f32 %v1634
        %vm1642 = vmor %vm1640, %vm1641
        %v1643 = vsel %vm1642, %v1634, %v1639
        %v1644 = vrsqrt.pop %v1633
        %v1645 = vmul.f32 %v1644, %v1633
        %v1646 = vmul.f32 %v1645, %v1644
        %v1647 = vmul.f32 0.5, %v1646
        %v1648 = vsub.f32 1.5, %v1647
        %v1649 = vmul.f32 %v1644, %v1648
        %vm1650 = vweird.f32 %v1633
        %vm1651 = vweird.f32 %v1644
        %vm1652 = vmor %vm1650, %vm1651
        %v1653 = vsel %vm1652, %v1644, %v1649
        %v1654 = vmul.f32 %v1620, %v1643
        %v1655 = vmul.f32 %v1621, %v1653
        %v1656 = vmul.f32 %v1654, %v1610
        %v1657 = vmul.f32 %v1655, %v1610
        %v1658 = vadd.f32 %v1656, %v1611
        %v1659 = vadd.f32 %v1657, %v1611
        %1660 = vst.msk [vmem:[%s234] sm:$0xff] %vm253, %v1658
        %1661 = vst.msk [vmem:[%s234 + $0x8] sm:$0xff] %vm253, %v1659
        %s1662 = sand.u32 %s142, 1
        %s1663 = scalar_lea.sflag [#allocation3], %s1662
        %s1664 = sand.u32 %s142, 1
        %s1665 = smul.addr %s1664, 16
        %s1666 = scalar_lea.vmem [#allocation2], %s1665
        // Predicated region
        $region41: #{_forward_impl.1} parent=39 // pred_check
          %p1667 = pneg %p152
        $region42: #{_forward_impl.1} parent=39 // pred_check_branch
          %1669 = sbr.rel (%p1667) target = $region44
        $region43: #{_forward_impl.1} parent=39 // pred_region
          %s1670 = smul.u32 2, %s19
          %1672 = vsyncadd %s1663, 0
          %s1673 = smul.addr %s1670, 8
          %s1674 = scalar_lea.hbm %s5, %s1673
          %s1675 = sshll.u32 %s1666, 4
          %s1676 = int_to_ptr.vmem [resolvable:$true] %s1675
          %s1677 = sshll.u32 %s1674, 4
          %s1678 = int_to_ptr.hbm [resolvable:$true] %s1677
          %1683 = dma.vmem_to_hbm [thread:$0]  %s1676, 256, %s1678, %s1663, 128, 128, 8
        $region44: #{_forward_impl.1} parent=39 // pred_fallthru
          _
      $region40: #{_forward_impl.1} parent=5 // pred_fallthru
        _
      %p1684 = scmp.le.s32.totalorder 2, %s14
      // Predicated region
      $region45: #{_forward_impl.1} parent=5 // pred_check
        %p1685 = pneg %p1684
      $region46: #{_forward_impl.1} parent=5 // pred_check_branch
        %1687 = sbr.rel (%p1685) target = $region48
      $region47: #{_forward_impl.1} parent=5 // pred_region
        %s1688 = ssub.s32 %s14, 2
        // Predicated region
        $region49: #{_forward_impl.1} parent=47 // pred_check
          %p1689 = pneg %p158
        $region50: #{_forward_impl.1} parent=47 // pred_check_branch
          %1691 = sbr.rel (%p1689) target = $region52
        $region51: #{_forward_impl.1} parent=47 // pred_region
          %s1692 = sand.u32 %s143, 1
          %s1693 = scalar_lea.sflag [#allocation3], %s1692
          %s1694 = sand.u32 %s143, 1
          %s1695 = smul.addr %s1694, 16
          %s1696 = scalar_lea.vmem [#allocation2], %s1695
          %1698 = dma.done %s1693, 256
        $region52: #{_forward_impl.1} parent=47 // pred_fallthru
          _
      $region48: #{_forward_impl.1} parent=5 // pred_fallthru
        _
    $region6: #{_forward_impl.1} parent=1 // loop_footer
      %s18 = sadd.s32 1, %s14
    $region7: #{_forward_impl.1} parent=1 // loop_footer_branch
      %13 = sbr.rel target = $region3
    $region8: #{_forward_impl.1} parent=1 // loop_exit
      _
    %1699 = vsyncpa [#allocation3], 1
    %s1700 = scalar_lea.sflag [#allocation3], 1
    %1701 = vsyncpa %s1700, 1

</llo_original>
